<compile_context>
chip_gen: v7x
topology: tpu7x:2x2x1
jax: 0.10.0
libtpu: 0.0.40
codegen_flags: <defaults>
</compile_context>

<pallas_src>
import numpy as np
import jax
import jax.numpy as jnp
from jax.experimental import pallas as pl
from jax.experimental.pallas import tpu as pltpu

C_OUT = 4
KH = 4
KW = 4


def _conv_relu_kernel(w_ref, x_ref, conv_ref, relu_ref):
    # w_ref:    SMEM, (C_OUT*KH*KW,) float32, flattened (c, kh, kw) row-major
    # x_ref:    VMEM, (TB, H, W)            -- W on the lane axis, H on sublanes
    # conv_ref: VMEM, (TB, C_OUT, Ho, Wo)   -- PyTorch NCHW layout, no transpose
    # relu_ref: VMEM, (TB, C_OUT, Ho, Wo)
    Ho = conv_ref.shape[2]
    Wo = conv_ref.shape[3]

    # Taps outermost, 4 channel accumulators: live set is one kw-shifted slice
    # (only 4 lane-axis shifts per step) + 4 accumulators, instead of 16 full
    # windows.  kh shifts are cheap sublane-offset slices of a value.
    acc = [None] * C_OUT
    for kw in range(KW):
        xk = x_ref[:, :, kw:kw + Wo]            # (TB, H, Wo), lane shift, once per kw
        for kh in range(KH):
            win = xk[:, kh:kh + Ho, :]          # (TB, Ho, Wo), sublane-offset slice
            for c in range(C_OUT):
                # NOTE: a constant-weight specialized path (filter_2 = -filter_1,
                # filter_4 = -filter_3, identical filter rows) could cut VALU MACs
                # 2-4x on v7x, but is not hard-coded so the kernel keeps general
                # nn.Parameter semantics.
                t = w_ref[c * (KH * KW) + kh * KW + kw] * win
                acc[c] = t if acc[c] is None else acc[c] + t

    # Per-channel stores (slice-only indexing): conv result and ReLU come from
    # the same f32 accumulator.
    for c in range(C_OUT):
        a = acc[c]
        conv_ref[:, c:c + 1, :, :] = a[:, None, :, :]
        relu_ref[:, c:c + 1, :, :] = jnp.maximum(a, 0.0)[:, None, :, :]


def _vmem_limit_bytes():
    """Per-generation VMEM limit: ~48 MiB on v7x (64 MiB physical),
    ~96 MiB on v5e / v6e (128 MiB physical)."""
    phys = None
    try:
        phys = getattr(pltpu.get_tpu_info(), "vmem_capacity_bytes", None)
    except Exception:
        phys = None
    if not phys:
        phys = 64 * 1024 * 1024          # conservative (v7x-sized) fallback
    return max(32 * 1024 * 1024, min(phys * 3 // 4, 96 * 1024 * 1024))


def _select_batch_tile(N, H, W, Ho, Wo, vmem_limit):
    """Largest batch tile that fits the VMEM budget, capped so the grid has
    >= 2 steps (v7x megacore sharding) whenever N >= 2."""
    bpe = 4  # float32
    per_image = (
        2 * H * W * bpe                          # input block (double-buffered)
        + 2 * 2 * C_OUT * Ho * Wo * bpe          # two output blocks (double-buffered)
        + (H * Wo + 6 * Ho * Wo) * bpe           # in-kernel temporaries + slack
    )
    budget = int(vmem_limit * 0.75)              # headroom for compiler scratch
    tb_fit = max(1, budget // per_image)
    tb0 = max(1, min(tb_fit, N if N < 2 else -(-N // 2)))
    grid_n = -(-N // tb0)                        # ceil division
    tb = -(-N // grid_n)                         # rebalance: minimal tile for grid_n steps
    return tb, grid_n


def net_forward(x, weight):
    """Pallas equivalent of Net.forward.

    x:      (N, 1, H, W) float32
    weight: (4, 1, 4, 4) float32
    returns (conv_x, activated_x), each (N, 4, H-3, W-3) float32 (NCHW).
    """
    N, Cin, H, W = x.shape
    assert Cin == 1
    assert H >= KH and W >= KW, "input smaller than the 4x4 kernel"
    Ho, Wo = H - KH + 1, W - KW + 1

    w_flat = weight.astype(jnp.float32).reshape(-1)      # (64,)
    xs = x[:, 0].astype(jnp.float32)                     # (N, H, W): free squeeze, no transpose

    vmem_limit = _vmem_limit_bytes()
    TB, grid_n = _select_batch_tile(N, H, W, Ho, Wo, vmem_limit)
    N_pad = TB * grid_n
    if N_pad != N:
        xs = jnp.pad(xs, ((0, N_pad - N), (0, 0), (0, 0)))

    out_shape = (
        jax.ShapeDtypeStruct((N_pad, C_OUT, Ho, Wo), jnp.float32),
        jax.ShapeDtypeStruct((N_pad, C_OUT, Ho, Wo), jnp.float32),
    )

    grid_spec = pltpu.PrefetchScalarGridSpec(
        num_scalar_prefetch=0,
        grid=(grid_n,),
        in_specs=[
            # 64 filter taps, scalar-indexed from SMEM inside the kernel.
            pl.BlockSpec(memory_space=pltpu.MemorySpace.SMEM),
            # One batch tile of images per grid step.
            pl.BlockSpec((TB, H, W), lambda n: (n, 0, 0)),
        ],
        out_specs=[
            pl.BlockSpec((TB, C_OUT, Ho, Wo), lambda n: (n, 0, 0, 0)),
            pl.BlockSpec((TB, C_OUT, Ho, Wo), lambda n: (n, 0, 0, 0)),
        ],
    )

    conv_x, activated_x = pl.pallas_call(
        _conv_relu_kernel,
        out_shape=out_shape,
        grid_spec=grid_spec,
        compiler_params=pltpu.CompilerParams(
            dimension_semantics=("parallel",),
            vmem_limit_bytes=vmem_limit,
        ),
    )(w_flat, xs)

    if N_pad != N:
        conv_x = conv_x[:N]
        activated_x = activated_x[:N]
    return conv_x, activated_x


def _make_weight():
    # Deterministic filter bank from the original script.
    filter_values = np.array(
        [[-1, -1, 1, 1], [-1, -1, 1, 1], [-1, -1, 1, 1], [-1, -1, 1, 1]]
    )
    filter_1 = filter_values
    filter_2 = -filter_1
    filter_3 = filter_1.T
    filter_4 = -filter_3
    filters = np.array([filter_1, filter_2, filter_3, filter_4])      # (4, 4, 4)
    return jnp.asarray(filters[:, None, :, :], dtype=jnp.float32)     # (4, 1, 4, 4)


if __name__ == "__main__":
    key = jax.random.PRNGKey(0)
    N, H, W = 2, 16, 16
    x = jax.random.normal(key, (N, 1, H, W), dtype=jnp.float32)
    weight = _make_weight()

    conv_x, activated_x = net_forward(x, weight)
    jax.block_until_ready((conv_x, activated_x))

    # Reference check against XLA's convolution (valid padding, stride 1).
    ref_conv = jax.lax.conv_general_dilated(
        x, weight, window_strides=(1, 1), padding="VALID",
        dimension_numbers=("NCHW", "OIHW", "NCHW"),
    )
    ref_relu = jnp.maximum(ref_conv, 0.0)
    np.testing.assert_allclose(np.asarray(conv_x), np.asarray(ref_conv), rtol=1e-5, atol=1e-5)
    np.testing.assert_allclose(np.asarray(activated_x), np.asarray(ref_relu), rtol=1e-5, atol=1e-5)

    print("KERNEL_OK")
</pallas_src>

<mosaic_0001>
module attributes {stable_mosaic.version = 11 : i64} {
  func.func @_conv_relu_kernel(%arg0: i32, %arg1: memref<64xf32, #tpu.memory_space<smem>>, %arg2: memref<1x16x16xf32, #tpu.memory_space<vmem>>, %arg3: memref<1x4x13x13xf32, #tpu.memory_space<vmem>>, %arg4: memref<1x4x13x13xf32, #tpu.memory_space<vmem>>) attributes {dimension_semantics = [#tpu.dimension_semantics<parallel>], iteration_bounds = array<i64: 2>, scalar_prefetch = 0 : i64, scratch_operands = 0 : i64, tpu.core_type = #tpu.core_type<tc>, window_params = [{transform_indices = @transform_0, window_bounds = array<i64: 64>}, {transform_indices = @transform_1, window_bounds = array<i64: 1, 16, 16>}, {transform_indices = @transform_2, window_bounds = array<i64: 1, 4, 13, 13>}, {transform_indices = @transform_3, window_bounds = array<i64: 1, 4, 13, 13>}]} {
    %c0 = arith.constant 0 : index
    %c0_0 = arith.constant 0 : index
    %c0_1 = arith.constant 0 : index
    %0 = vector.load %arg2[%c0, %c0_0, %c0_1] : memref<1x16x16xf32, #tpu.memory_space<vmem>>, vector<1x16x13xf32>
    %1 = vector.extract_strided_slice %0 {offsets = [0, 0, 0], sizes = [1, 13, 13], strides = [1, 1, 1]} : vector<1x16x13xf32> to vector<1x13x13xf32>
    %c0_2 = arith.constant 0 : index
    %2 = memref.load %arg1[%c0_2] : memref<64xf32, #tpu.memory_space<smem>>
    %3 = vector.broadcast %2 : f32 to vector<1x13x13xf32>
    %4 = arith.mulf %3, %1 : vector<1x13x13xf32>
    %c16 = arith.constant 16 : index
    %5 = memref.load %arg1[%c16] : memref<64xf32, #tpu.memory_space<smem>>
    %6 = vector.broadcast %5 : f32 to vector<1x13x13xf32>
    %7 = arith.mulf %6, %1 : vector<1x13x13xf32>
    %c32 = arith.constant 32 : index
    %8 = memref.load %arg1[%c32] : memref<64xf32, #tpu.memory_space<smem>>
    %9 = vector.broadcast %8 : f32 to vector<1x13x13xf32>
    %10 = arith.mulf %9, %1 : vector<1x13x13xf32>
    %c48 = arith.constant 48 : index
    %11 = memref.load %arg1[%c48] : memref<64xf32, #tpu.memory_space<smem>>
    %12 = vector.broadcast %11 : f32 to vector<1x13x13xf32>
    %13 = arith.mulf %12, %1 : vector<1x13x13xf32>
    %14 = vector.extract_strided_slice %0 {offsets = [0, 1, 0], sizes = [1, 13, 13], strides = [1, 1, 1]} : vector<1x16x13xf32> to vector<1x13x13xf32>
    %c4 = arith.constant 4 : index
    %15 = memref.load %arg1[%c4] : memref<64xf32, #tpu.memory_space<smem>>
    %16 = vector.broadcast %15 : f32 to vector<1x13x13xf32>
    %17 = arith.mulf %16, %14 : vector<1x13x13xf32>
    %18 = arith.addf %4, %17 : vector<1x13x13xf32>
    %c20 = arith.constant 20 : index
    %19 = memref.load %arg1[%c20] : memref<64xf32, #tpu.memory_space<smem>>
    %20 = vector.broadcast %19 : f32 to vector<1x13x13xf32>
    %21 = arith.mulf %20, %14 : vector<1x13x13xf32>
    %22 = arith.addf %7, %21 : vector<1x13x13xf32>
    %c36 = arith.constant 36 : index
    %23 = memref.load %arg1[%c36] : memref<64xf32, #tpu.memory_space<smem>>
    %24 = vector.broadcast %23 : f32 to vector<1x13x13xf32>
    %25 = arith.mulf %24, %14 : vector<1x13x13xf32>
    %26 = arith.addf %10, %25 : vector<1x13x13xf32>
    %c52 = arith.constant 52 : index
    %27 = memref.load %arg1[%c52] : memref<64xf32, #tpu.memory_space<smem>>
    %28 = vector.broadcast %27 : f32 to vector<1x13x13xf32>
    %29 = arith.mulf %28, %14 : vector<1x13x13xf32>
    %30 = arith.addf %13, %29 : vector<1x13x13xf32>
    %31 = vector.extract_strided_slice %0 {offsets = [0, 2, 0], sizes = [1, 13, 13], strides = [1, 1, 1]} : vector<1x16x13xf32> to vector<1x13x13xf32>
    %c8 = arith.constant 8 : index
    %32 = memref.load %arg1[%c8] : memref<64xf32, #tpu.memory_space<smem>>
    %33 = vector.broadcast %32 : f32 to vector<1x13x13xf32>
    %34 = arith.mulf %33, %31 : vector<1x13x13xf32>
    %35 = arith.addf %18, %34 : vector<1x13x13xf32>
    %c24 = arith.constant 24 : index
    %36 = memref.load %arg1[%c24] : memref<64xf32, #tpu.memory_space<smem>>
    %37 = vector.broadcast %36 : f32 to vector<1x13x13xf32>
    %38 = arith.mulf %37, %31 : vector<1x13x13xf32>
    %39 = arith.addf %22, %38 : vector<1x13x13xf32>
    %c40 = arith.constant 40 : index
    %40 = memref.load %arg1[%c40] : memref<64xf32, #tpu.memory_space<smem>>
    %41 = vector.broadcast %40 : f32 to vector<1x13x13xf32>
    %42 = arith.mulf %41, %31 : vector<1x13x13xf32>
    %43 = arith.addf %26, %42 : vector<1x13x13xf32>
    %c56 = arith.constant 56 : index
    %44 = memref.load %arg1[%c56] : memref<64xf32, #tpu.memory_space<smem>>
    %45 = vector.broadcast %44 : f32 to vector<1x13x13xf32>
    %46 = arith.mulf %45, %31 : vector<1x13x13xf32>
    %47 = arith.addf %30, %46 : vector<1x13x13xf32>
    %48 = vector.extract_strided_slice %0 {offsets = [0, 3, 0], sizes = [1, 13, 13], strides = [1, 1, 1]} : vector<1x16x13xf32> to vector<1x13x13xf32>
    %c12 = arith.constant 12 : index
    %49 = memref.load %arg1[%c12] : memref<64xf32, #tpu.memory_space<smem>>
    %50 = vector.broadcast %49 : f32 to vector<1x13x13xf32>
    %51 = arith.mulf %50, %48 : vector<1x13x13xf32>
    %52 = arith.addf %35, %51 : vector<1x13x13xf32>
    %c28 = arith.constant 28 : index
    %53 = memref.load %arg1[%c28] : memref<64xf32, #tpu.memory_space<smem>>
    %54 = vector.broadcast %53 : f32 to vector<1x13x13xf32>
    %55 = arith.mulf %54, %48 : vector<1x13x13xf32>
    %56 = arith.addf %39, %55 : vector<1x13x13xf32>
    %c44 = arith.constant 44 : index
    %57 = memref.load %arg1[%c44] : memref<64xf32, #tpu.memory_space<smem>>
    %58 = vector.broadcast %57 : f32 to vector<1x13x13xf32>
    %59 = arith.mulf %58, %48 : vector<1x13x13xf32>
    %60 = arith.addf %43, %59 : vector<1x13x13xf32>
    %c60 = arith.constant 60 : index
    %61 = memref.load %arg1[%c60] : memref<64xf32, #tpu.memory_space<smem>>
    %62 = vector.broadcast %61 : f32 to vector<1x13x13xf32>
    %63 = arith.mulf %62, %48 : vector<1x13x13xf32>
    %64 = arith.addf %47, %63 : vector<1x13x13xf32>
    %c0_3 = arith.constant 0 : index
    %c0_4 = arith.constant 0 : index
    %c1 = arith.constant 1 : index
    %65 = vector.load %arg2[%c0_3, %c0_4, %c1] : memref<1x16x16xf32, #tpu.memory_space<vmem>>, vector<1x16x13xf32>
    %66 = vector.extract_strided_slice %65 {offsets = [0, 0, 0], sizes = [1, 13, 13], strides = [1, 1, 1]} : vector<1x16x13xf32> to vector<1x13x13xf32>
    %c1_5 = arith.constant 1 : index
    %67 = memref.load %arg1[%c1_5] : memref<64xf32, #tpu.memory_space<smem>>
    %68 = vector.broadcast %67 : f32 to vector<1x13x13xf32>
    %69 = arith.mulf %68, %66 : vector<1x13x13xf32>
    %70 = arith.addf %52, %69 : vector<1x13x13xf32>
    %c17 = arith.constant 17 : index
    %71 = memref.load %arg1[%c17] : memref<64xf32, #tpu.memory_space<smem>>
    %72 = vector.broadcast %71 : f32 to vector<1x13x13xf32>
    %73 = arith.mulf %72, %66 : vector<1x13x13xf32>
    %74 = arith.addf %56, %73 : vector<1x13x13xf32>
    %c33 = arith.constant 33 : index
    %75 = memref.load %arg1[%c33] : memref<64xf32, #tpu.memory_space<smem>>
    %76 = vector.broadcast %75 : f32 to vector<1x13x13xf32>
    %77 = arith.mulf %76, %66 : vector<1x13x13xf32>
    %78 = arith.addf %60, %77 : vector<1x13x13xf32>
    %c49 = arith.constant 49 : index
    %79 = memref.load %arg1[%c49] : memref<64xf32, #tpu.memory_space<smem>>
    %80 = vector.broadcast %79 : f32 to vector<1x13x13xf32>
    %81 = arith.mulf %80, %66 : vector<1x13x13xf32>
    %82 = arith.addf %64, %81 : vector<1x13x13xf32>
    %83 = vector.extract_strided_slice %65 {offsets = [0, 1, 0], sizes = [1, 13, 13], strides = [1, 1, 1]} : vector<1x16x13xf32> to vector<1x13x13xf32>
    %c5 = arith.constant 5 : index
    %84 = memref.load %arg1[%c5] : memref<64xf32, #tpu.memory_space<smem>>
    %85 = vector.broadcast %84 : f32 to vector<1x13x13xf32>
    %86 = arith.mulf %85, %83 : vector<1x13x13xf32>
    %87 = arith.addf %70, %86 : vector<1x13x13xf32>
    %c21 = arith.constant 21 : index
    %88 = memref.load %arg1[%c21] : memref<64xf32, #tpu.memory_space<smem>>
    %89 = vector.broadcast %88 : f32 to vector<1x13x13xf32>
    %90 = arith.mulf %89, %83 : vector<1x13x13xf32>
    %91 = arith.addf %74, %90 : vector<1x13x13xf32>
    %c37 = arith.constant 37 : index
    %92 = memref.load %arg1[%c37] : memref<64xf32, #tpu.memory_space<smem>>
    %93 = vector.broadcast %92 : f32 to vector<1x13x13xf32>
    %94 = arith.mulf %93, %83 : vector<1x13x13xf32>
    %95 = arith.addf %78, %94 : vector<1x13x13xf32>
    %c53 = arith.constant 53 : index
    %96 = memref.load %arg1[%c53] : memref<64xf32, #tpu.memory_space<smem>>
    %97 = vector.broadcast %96 : f32 to vector<1x13x13xf32>
    %98 = arith.mulf %97, %83 : vector<1x13x13xf32>
    %99 = arith.addf %82, %98 : vector<1x13x13xf32>
    %100 = vector.extract_strided_slice %65 {offsets = [0, 2, 0], sizes = [1, 13, 13], strides = [1, 1, 1]} : vector<1x16x13xf32> to vector<1x13x13xf32>
    %c9 = arith.constant 9 : index
    %101 = memref.load %arg1[%c9] : memref<64xf32, #tpu.memory_space<smem>>
    %102 = vector.broadcast %101 : f32 to vector<1x13x13xf32>
    %103 = arith.mulf %102, %100 : vector<1x13x13xf32>
    %104 = arith.addf %87, %103 : vector<1x13x13xf32>
    %c25 = arith.constant 25 : index
    %105 = memref.load %arg1[%c25] : memref<64xf32, #tpu.memory_space<smem>>
    %106 = vector.broadcast %105 : f32 to vector<1x13x13xf32>
    %107 = arith.mulf %106, %100 : vector<1x13x13xf32>
    %108 = arith.addf %91, %107 : vector<1x13x13xf32>
    %c41 = arith.constant 41 : index
    %109 = memref.load %arg1[%c41] : memref<64xf32, #tpu.memory_space<smem>>
    %110 = vector.broadcast %109 : f32 to vector<1x13x13xf32>
    %111 = arith.mulf %110, %100 : vector<1x13x13xf32>
    %112 = arith.addf %95, %111 : vector<1x13x13xf32>
    %c57 = arith.constant 57 : index
    %113 = memref.load %arg1[%c57] : memref<64xf32, #tpu.memory_space<smem>>
    %114 = vector.broadcast %113 : f32 to vector<1x13x13xf32>
    %115 = arith.mulf %114, %100 : vector<1x13x13xf32>
    %116 = arith.addf %99, %115 : vector<1x13x13xf32>
    %117 = vector.extract_strided_slice %65 {offsets = [0, 3, 0], sizes = [1, 13, 13], strides = [1, 1, 1]} : vector<1x16x13xf32> to vector<1x13x13xf32>
    %c13 = arith.constant 13 : index
    %118 = memref.load %arg1[%c13] : memref<64xf32, #tpu.memory_space<smem>>
    %119 = vector.broadcast %118 : f32 to vector<1x13x13xf32>
    %120 = arith.mulf %119, %117 : vector<1x13x13xf32>
    %121 = arith.addf %104, %120 : vector<1x13x13xf32>
    %c29 = arith.constant 29 : index
    %122 = memref.load %arg1[%c29] : memref<64xf32, #tpu.memory_space<smem>>
    %123 = vector.broadcast %122 : f32 to vector<1x13x13xf32>
    %124 = arith.mulf %123, %117 : vector<1x13x13xf32>
    %125 = arith.addf %108, %124 : vector<1x13x13xf32>
    %c45 = arith.constant 45 : index
    %126 = memref.load %arg1[%c45] : memref<64xf32, #tpu.memory_space<smem>>
    %127 = vector.broadcast %126 : f32 to vector<1x13x13xf32>
    %128 = arith.mulf %127, %117 : vector<1x13x13xf32>
    %129 = arith.addf %112, %128 : vector<1x13x13xf32>
    %c61 = arith.constant 61 : index
    %130 = memref.load %arg1[%c61] : memref<64xf32, #tpu.memory_space<smem>>
    %131 = vector.broadcast %130 : f32 to vector<1x13x13xf32>
    %132 = arith.mulf %131, %117 : vector<1x13x13xf32>
    %133 = arith.addf %116, %132 : vector<1x13x13xf32>
    %c0_6 = arith.constant 0 : index
    %c0_7 = arith.constant 0 : index
    %c2 = arith.constant 2 : index
    %134 = vector.load %arg2[%c0_6, %c0_7, %c2] : memref<1x16x16xf32, #tpu.memory_space<vmem>>, vector<1x16x13xf32>
    %135 = vector.extract_strided_slice %134 {offsets = [0, 0, 0], sizes = [1, 13, 13], strides = [1, 1, 1]} : vector<1x16x13xf32> to vector<1x13x13xf32>
    %c2_8 = arith.constant 2 : index
    %136 = memref.load %arg1[%c2_8] : memref<64xf32, #tpu.memory_space<smem>>
    %137 = vector.broadcast %136 : f32 to vector<1x13x13xf32>
    %138 = arith.mulf %137, %135 : vector<1x13x13xf32>
    %139 = arith.addf %121, %138 : vector<1x13x13xf32>
    %c18 = arith.constant 18 : index
    %140 = memref.load %arg1[%c18] : memref<64xf32, #tpu.memory_space<smem>>
    %141 = vector.broadcast %140 : f32 to vector<1x13x13xf32>
    %142 = arith.mulf %141, %135 : vector<1x13x13xf32>
    %143 = arith.addf %125, %142 : vector<1x13x13xf32>
    %c34 = arith.constant 34 : index
    %144 = memref.load %arg1[%c34] : memref<64xf32, #tpu.memory_space<smem>>
    %145 = vector.broadcast %144 : f32 to vector<1x13x13xf32>
    %146 = arith.mulf %145, %135 : vector<1x13x13xf32>
    %147 = arith.addf %129, %146 : vector<1x13x13xf32>
    %c50 = arith.constant 50 : index
    %148 = memref.load %arg1[%c50] : memref<64xf32, #tpu.memory_space<smem>>
    %149 = vector.broadcast %148 : f32 to vector<1x13x13xf32>
    %150 = arith.mulf %149, %135 : vector<1x13x13xf32>
    %151 = arith.addf %133, %150 : vector<1x13x13xf32>
    %152 = vector.extract_strided_slice %134 {offsets = [0, 1, 0], sizes = [1, 13, 13], strides = [1, 1, 1]} : vector<1x16x13xf32> to vector<1x13x13xf32>
    %c6 = arith.constant 6 : index
    %153 = memref.load %arg1[%c6] : memref<64xf32, #tpu.memory_space<smem>>
    %154 = vector.broadcast %153 : f32 to vector<1x13x13xf32>
    %155 = arith.mulf %154, %152 : vector<1x13x13xf32>
    %156 = arith.addf %139, %155 : vector<1x13x13xf32>
    %c22 = arith.constant 22 : index
    %157 = memref.load %arg1[%c22] : memref<64xf32, #tpu.memory_space<smem>>
    %158 = vector.broadcast %157 : f32 to vector<1x13x13xf32>
    %159 = arith.mulf %158, %152 : vector<1x13x13xf32>
    %160 = arith.addf %143, %159 : vector<1x13x13xf32>
    %c38 = arith.constant 38 : index
    %161 = memref.load %arg1[%c38] : memref<64xf32, #tpu.memory_space<smem>>
    %162 = vector.broadcast %161 : f32 to vector<1x13x13xf32>
    %163 = arith.mulf %162, %152 : vector<1x13x13xf32>
    %164 = arith.addf %147, %163 : vector<1x13x13xf32>
    %c54 = arith.constant 54 : index
    %165 = memref.load %arg1[%c54] : memref<64xf32, #tpu.memory_space<smem>>
    %166 = vector.broadcast %165 : f32 to vector<1x13x13xf32>
    %167 = arith.mulf %166, %152 : vector<1x13x13xf32>
    %168 = arith.addf %151, %167 : vector<1x13x13xf32>
    %169 = vector.extract_strided_slice %134 {offsets = [0, 2, 0], sizes = [1, 13, 13], strides = [1, 1, 1]} : vector<1x16x13xf32> to vector<1x13x13xf32>
    %c10 = arith.constant 10 : index
    %170 = memref.load %arg1[%c10] : memref<64xf32, #tpu.memory_space<smem>>
    %171 = vector.broadcast %170 : f32 to vector<1x13x13xf32>
    %172 = arith.mulf %171, %169 : vector<1x13x13xf32>
    %173 = arith.addf %156, %172 : vector<1x13x13xf32>
    %c26 = arith.constant 26 : index
    %174 = memref.load %arg1[%c26] : memref<64xf32, #tpu.memory_space<smem>>
    %175 = vector.broadcast %174 : f32 to vector<1x13x13xf32>
    %176 = arith.mulf %175, %169 : vector<1x13x13xf32>
    %177 = arith.addf %160, %176 : vector<1x13x13xf32>
    %c42 = arith.constant 42 : index
    %178 = memref.load %arg1[%c42] : memref<64xf32, #tpu.memory_space<smem>>
    %179 = vector.broadcast %178 : f32 to vector<1x13x13xf32>
    %180 = arith.mulf %179, %169 : vector<1x13x13xf32>
    %181 = arith.addf %164, %180 : vector<1x13x13xf32>
    %c58 = arith.constant 58 : index
    %182 = memref.load %arg1[%c58] : memref<64xf32, #tpu.memory_space<smem>>
    %183 = vector.broadcast %182 : f32 to vector<1x13x13xf32>
    %184 = arith.mulf %183, %169 : vector<1x13x13xf32>
    %185 = arith.addf %168, %184 : vector<1x13x13xf32>
    %186 = vector.extract_strided_slice %134 {offsets = [0, 3, 0], sizes = [1, 13, 13], strides = [1, 1, 1]} : vector<1x16x13xf32> to vector<1x13x13xf32>
    %c14 = arith.constant 14 : index
    %187 = memref.load %arg1[%c14] : memref<64xf32, #tpu.memory_space<smem>>
    %188 = vector.broadcast %187 : f32 to vector<1x13x13xf32>
    %189 = arith.mulf %188, %186 : vector<1x13x13xf32>
    %190 = arith.addf %173, %189 : vector<1x13x13xf32>
    %c30 = arith.constant 30 : index
    %191 = memref.load %arg1[%c30] : memref<64xf32, #tpu.memory_space<smem>>
    %192 = vector.broadcast %191 : f32 to vector<1x13x13xf32>
    %193 = arith.mulf %192, %186 : vector<1x13x13xf32>
    %194 = arith.addf %177, %193 : vector<1x13x13xf32>
    %c46 = arith.constant 46 : index
    %195 = memref.load %arg1[%c46] : memref<64xf32, #tpu.memory_space<smem>>
    %196 = vector.broadcast %195 : f32 to vector<1x13x13xf32>
    %197 = arith.mulf %196, %186 : vector<1x13x13xf32>
    %198 = arith.addf %181, %197 : vector<1x13x13xf32>
    %c62 = arith.constant 62 : index
    %199 = memref.load %arg1[%c62] : memref<64xf32, #tpu.memory_space<smem>>
    %200 = vector.broadcast %199 : f32 to vector<1x13x13xf32>
    %201 = arith.mulf %200, %186 : vector<1x13x13xf32>
    %202 = arith.addf %185, %201 : vector<1x13x13xf32>
    %c0_9 = arith.constant 0 : index
    %c0_10 = arith.constant 0 : index
    %c3 = arith.constant 3 : index
    %203 = vector.load %arg2[%c0_9, %c0_10, %c3] : memref<1x16x16xf32, #tpu.memory_space<vmem>>, vector<1x16x13xf32>
    %204 = vector.extract_strided_slice %203 {offsets = [0, 0, 0], sizes = [1, 13, 13], strides = [1, 1, 1]} : vector<1x16x13xf32> to vector<1x13x13xf32>
    %c3_11 = arith.constant 3 : index
    %205 = memref.load %arg1[%c3_11] : memref<64xf32, #tpu.memory_space<smem>>
    %206 = vector.broadcast %205 : f32 to vector<1x13x13xf32>
    %207 = arith.mulf %206, %204 : vector<1x13x13xf32>
    %208 = arith.addf %190, %207 : vector<1x13x13xf32>
    %c19 = arith.constant 19 : index
    %209 = memref.load %arg1[%c19] : memref<64xf32, #tpu.memory_space<smem>>
    %210 = vector.broadcast %209 : f32 to vector<1x13x13xf32>
    %211 = arith.mulf %210, %204 : vector<1x13x13xf32>
    %212 = arith.addf %194, %211 : vector<1x13x13xf32>
    %c35 = arith.constant 35 : index
    %213 = memref.load %arg1[%c35] : memref<64xf32, #tpu.memory_space<smem>>
    %214 = vector.broadcast %213 : f32 to vector<1x13x13xf32>
    %215 = arith.mulf %214, %204 : vector<1x13x13xf32>
    %216 = arith.addf %198, %215 : vector<1x13x13xf32>
    %c51 = arith.constant 51 : index
    %217 = memref.load %arg1[%c51] : memref<64xf32, #tpu.memory_space<smem>>
    %218 = vector.broadcast %217 : f32 to vector<1x13x13xf32>
    %219 = arith.mulf %218, %204 : vector<1x13x13xf32>
    %220 = arith.addf %202, %219 : vector<1x13x13xf32>
    %221 = vector.extract_strided_slice %203 {offsets = [0, 1, 0], sizes = [1, 13, 13], strides = [1, 1, 1]} : vector<1x16x13xf32> to vector<1x13x13xf32>
    %c7 = arith.constant 7 : index
    %222 = memref.load %arg1[%c7] : memref<64xf32, #tpu.memory_space<smem>>
    %223 = vector.broadcast %222 : f32 to vector<1x13x13xf32>
    %224 = arith.mulf %223, %221 : vector<1x13x13xf32>
    %225 = arith.addf %208, %224 : vector<1x13x13xf32>
    %c23 = arith.constant 23 : index
    %226 = memref.load %arg1[%c23] : memref<64xf32, #tpu.memory_space<smem>>
    %227 = vector.broadcast %226 : f32 to vector<1x13x13xf32>
    %228 = arith.mulf %227, %221 : vector<1x13x13xf32>
    %229 = arith.addf %212, %228 : vector<1x13x13xf32>
    %c39 = arith.constant 39 : index
    %230 = memref.load %arg1[%c39] : memref<64xf32, #tpu.memory_space<smem>>
    %231 = vector.broadcast %230 : f32 to vector<1x13x13xf32>
    %232 = arith.mulf %231, %221 : vector<1x13x13xf32>
    %233 = arith.addf %216, %232 : vector<1x13x13xf32>
    %c55 = arith.constant 55 : index
    %234 = memref.load %arg1[%c55] : memref<64xf32, #tpu.memory_space<smem>>
    %235 = vector.broadcast %234 : f32 to vector<1x13x13xf32>
    %236 = arith.mulf %235, %221 : vector<1x13x13xf32>
    %237 = arith.addf %220, %236 : vector<1x13x13xf32>
    %238 = vector.extract_strided_slice %203 {offsets = [0, 2, 0], sizes = [1, 13, 13], strides = [1, 1, 1]} : vector<1x16x13xf32> to vector<1x13x13xf32>
    %c11 = arith.constant 11 : index
    %239 = memref.load %arg1[%c11] : memref<64xf32, #tpu.memory_space<smem>>
    %240 = vector.broadcast %239 : f32 to vector<1x13x13xf32>
    %241 = arith.mulf %240, %238 : vector<1x13x13xf32>
    %242 = arith.addf %225, %241 : vector<1x13x13xf32>
    %c27 = arith.constant 27 : index
    %243 = memref.load %arg1[%c27] : memref<64xf32, #tpu.memory_space<smem>>
    %244 = vector.broadcast %243 : f32 to vector<1x13x13xf32>
    %245 = arith.mulf %244, %238 : vector<1x13x13xf32>
    %246 = arith.addf %229, %245 : vector<1x13x13xf32>
    %c43 = arith.constant 43 : index
    %247 = memref.load %arg1[%c43] : memref<64xf32, #tpu.memory_space<smem>>
    %248 = vector.broadcast %247 : f32 to vector<1x13x13xf32>
    %249 = arith.mulf %248, %238 : vector<1x13x13xf32>
    %250 = arith.addf %233, %249 : vector<1x13x13xf32>
    %c59 = arith.constant 59 : index
    %251 = memref.load %arg1[%c59] : memref<64xf32, #tpu.memory_space<smem>>
    %252 = vector.broadcast %251 : f32 to vector<1x13x13xf32>
    %253 = arith.mulf %252, %238 : vector<1x13x13xf32>
    %254 = arith.addf %237, %253 : vector<1x13x13xf32>
    %255 = vector.extract_strided_slice %203 {offsets = [0, 3, 0], sizes = [1, 13, 13], strides = [1, 1, 1]} : vector<1x16x13xf32> to vector<1x13x13xf32>
    %c15 = arith.constant 15 : index
    %256 = memref.load %arg1[%c15] : memref<64xf32, #tpu.memory_space<smem>>
    %257 = vector.broadcast %256 : f32 to vector<1x13x13xf32>
    %258 = arith.mulf %257, %255 : vector<1x13x13xf32>
    %259 = arith.addf %242, %258 : vector<1x13x13xf32>
    %c31 = arith.constant 31 : index
    %260 = memref.load %arg1[%c31] : memref<64xf32, #tpu.memory_space<smem>>
    %261 = vector.broadcast %260 : f32 to vector<1x13x13xf32>
    %262 = arith.mulf %261, %255 : vector<1x13x13xf32>
    %263 = arith.addf %246, %262 : vector<1x13x13xf32>
    %c47 = arith.constant 47 : index
    %264 = memref.load %arg1[%c47] : memref<64xf32, #tpu.memory_space<smem>>
    %265 = vector.broadcast %264 : f32 to vector<1x13x13xf32>
    %266 = arith.mulf %265, %255 : vector<1x13x13xf32>
    %267 = arith.addf %250, %266 : vector<1x13x13xf32>
    %c63 = arith.constant 63 : index
    %268 = memref.load %arg1[%c63] : memref<64xf32, #tpu.memory_space<smem>>
    %269 = vector.broadcast %268 : f32 to vector<1x13x13xf32>
    %270 = arith.mulf %269, %255 : vector<1x13x13xf32>
    %271 = arith.addf %254, %270 : vector<1x13x13xf32>
    %272 = vector.shape_cast %259 : vector<1x13x13xf32> to vector<1x1x13x13xf32>
    %c0_12 = arith.constant 0 : index
    %c0_13 = arith.constant 0 : index
    %c0_14 = arith.constant 0 : index
    %c0_15 = arith.constant 0 : index
    %273 = vector.load %arg3[%c0_12, %c0_13, %c0_14, %c0_15] : memref<1x4x13x13xf32, #tpu.memory_space<vmem>>, vector<1x1x13x13xf32>
    tpu.vector_store %arg3[%c0_12, %c0_13, %c0_14, %c0_15], %272 {strides = array<i32>} : memref<1x4x13x13xf32, #tpu.memory_space<vmem>>, vector<1x1x13x13xf32>,
    %cst = arith.constant 0.000000e+00 : f32
    %274 = vector.broadcast %cst : f32 to vector<1x13x13xf32>
    %275 = arith.maximumf %259, %274 : vector<1x13x13xf32>
    %276 = vector.shape_cast %275 : vector<1x13x13xf32> to vector<1x1x13x13xf32>
    %c0_16 = arith.constant 0 : index
    %c0_17 = arith.constant 0 : index
    %c0_18 = arith.constant 0 : index
    %c0_19 = arith.constant 0 : index
    %277 = vector.load %arg4[%c0_16, %c0_17, %c0_18, %c0_19] : memref<1x4x13x13xf32, #tpu.memory_space<vmem>>, vector<1x1x13x13xf32>
    tpu.vector_store %arg4[%c0_16, %c0_17, %c0_18, %c0_19], %276 {strides = array<i32>} : memref<1x4x13x13xf32, #tpu.memory_space<vmem>>, vector<1x1x13x13xf32>,
    %278 = vector.shape_cast %263 : vector<1x13x13xf32> to vector<1x1x13x13xf32>
    %c0_20 = arith.constant 0 : index
    %c1_21 = arith.constant 1 : index
    %c0_22 = arith.constant 0 : index
    %c0_23 = arith.constant 0 : index
    %279 = vector.load %arg3[%c0_20, %c1_21, %c0_22, %c0_23] : memref<1x4x13x13xf32, #tpu.memory_space<vmem>>, vector<1x1x13x13xf32>
    tpu.vector_store %arg3[%c0_20, %c1_21, %c0_22, %c0_23], %278 {strides = array<i32>} : memref<1x4x13x13xf32, #tpu.memory_space<vmem>>, vector<1x1x13x13xf32>,
    %cst_24 = arith.constant 0.000000e+00 : f32
    %280 = vector.broadcast %cst_24 : f32 to vector<1x13x13xf32>
    %281 = arith.maximumf %263, %280 : vector<1x13x13xf32>
    %282 = vector.shape_cast %281 : vector<1x13x13xf32> to vector<1x1x13x13xf32>
    %c0_25 = arith.constant 0 : index
    %c1_26 = arith.constant 1 : index
    %c0_27 = arith.constant 0 : index
    %c0_28 = arith.constant 0 : index
    %283 = vector.load %arg4[%c0_25, %c1_26, %c0_27, %c0_28] : memref<1x4x13x13xf32, #tpu.memory_space<vmem>>, vector<1x1x13x13xf32>
    tpu.vector_store %arg4[%c0_25, %c1_26, %c0_27, %c0_28], %282 {strides = array<i32>} : memref<1x4x13x13xf32, #tpu.memory_space<vmem>>, vector<1x1x13x13xf32>,
    %284 = vector.shape_cast %267 : vector<1x13x13xf32> to vector<1x1x13x13xf32>
    %c0_29 = arith.constant 0 : index
    %c2_30 = arith.constant 2 : index
    %c0_31 = arith.constant 0 : index
    %c0_32 = arith.constant 0 : index
    %285 = vector.load %arg3[%c0_29, %c2_30, %c0_31, %c0_32] : memref<1x4x13x13xf32, #tpu.memory_space<vmem>>, vector<1x1x13x13xf32>
    tpu.vector_store %arg3[%c0_29, %c2_30, %c0_31, %c0_32], %284 {strides = array<i32>} : memref<1x4x13x13xf32, #tpu.memory_space<vmem>>, vector<1x1x13x13xf32>,
    %cst_33 = arith.constant 0.000000e+00 : f32
    %286 = vector.broadcast %cst_33 : f32 to vector<1x13x13xf32>
    %287 = arith.maximumf %267, %286 : vector<1x13x13xf32>
    %288 = vector.shape_cast %287 : vector<1x13x13xf32> to vector<1x1x13x13xf32>
    %c0_34 = arith.constant 0 : index
    %c2_35 = arith.constant 2 : index
    %c0_36 = arith.constant 0 : index
    %c0_37 = arith.constant 0 : index
    %289 = vector.load %arg4[%c0_34, %c2_35, %c0_36, %c0_37] : memref<1x4x13x13xf32, #tpu.memory_space<vmem>>, vector<1x1x13x13xf32>
    tpu.vector_store %arg4[%c0_34, %c2_35, %c0_36, %c0_37], %288 {strides = array<i32>} : memref<1x4x13x13xf32, #tpu.memory_space<vmem>>, vector<1x1x13x13xf32>,
    %290 = vector.shape_cast %271 : vector<1x13x13xf32> to vector<1x1x13x13xf32>
    %c0_38 = arith.constant 0 : index
    %c3_39 = arith.constant 3 : index
    %c0_40 = arith.constant 0 : index
    %c0_41 = arith.constant 0 : index
    %291 = vector.load %arg3[%c0_38, %c3_39, %c0_40, %c0_41] : memref<1x4x13x13xf32, #tpu.memory_space<vmem>>, vector<1x1x13x13xf32>
    tpu.vector_store %arg3[%c0_38, %c3_39, %c0_40, %c0_41], %290 {strides = array<i32>} : memref<1x4x13x13xf32, #tpu.memory_space<vmem>>, vector<1x1x13x13xf32>,
    %cst_42 = arith.constant 0.000000e+00 : f32
    %292 = vector.broadcast %cst_42 : f32 to vector<1x13x13xf32>
    %293 = arith.maximumf %271, %292 : vector<1x13x13xf32>
    %294 = vector.shape_cast %293 : vector<1x13x13xf32> to vector<1x1x13x13xf32>
    %c0_43 = arith.constant 0 : index
    %c3_44 = arith.constant 3 : index
    %c0_45 = arith.constant 0 : index
    %c0_46 = arith.constant 0 : index
    %295 = vector.load %arg4[%c0_43, %c3_44, %c0_45, %c0_46] : memref<1x4x13x13xf32, #tpu.memory_space<vmem>>, vector<1x1x13x13xf32>
    tpu.vector_store %arg4[%c0_43, %c3_44, %c0_45, %c0_46], %294 {strides = array<i32>} : memref<1x4x13x13xf32, #tpu.memory_space<vmem>>, vector<1x1x13x13xf32>,
    return
  }
  func.func @transform_0(%arg0: i32) -> i32 {
    %c0_i32 = arith.constant 0 : i32
    %c0_i32_0 = arith.constant 0 : i32
    return %c0_i32 : i32
  }
  func.func @transform_1(%arg0: i32) -> (i32, i32, i32) {
    %c0_i32 = arith.constant 0 : i32
    %c0_i32_0 = arith.constant 0 : i32
    %c0_i32_1 = arith.constant 0 : i32
    return %arg0, %c0_i32, %c0_i32_0 : i32, i32, i32
  }
  func.func @transform_2(%arg0: i32) -> (i32, i32, i32, i32) {
    %c0_i32 = arith.constant 0 : i32
    %c0_i32_0 = arith.constant 0 : i32
    %c0_i32_1 = arith.constant 0 : i32
    %c0_i32_2 = arith.constant 0 : i32
    return %arg0, %c0_i32, %c0_i32_0, %c0_i32_1 : i32, i32, i32, i32
  }
  func.func @transform_3(%arg0: i32) -> (i32, i32, i32, i32) {
    %c0_i32 = arith.constant 0 : i32
    %c0_i32_0 = arith.constant 0 : i32
    %c0_i32_1 = arith.constant 0 : i32
    %c0_i32_2 = arith.constant 0 : i32
    return %arg0, %c0_i32, %c0_i32_0, %c0_i32_1 : i32, i32, i32, i32
  }
}

</mosaic_0001>

<llo_original>
// kernel: tpu_custom_call.1
$region0: #{tpu_custom_call.1}
  #allocation0 [shape = 'u32[]', space=smem, size = 0x4, offset = 0x4, fixed_abs, tag = 'smem constant byte address 0x4 - core index']
  #allocation1 [shape = 'u32[144,128]{1,0:T(1,128)}', space=vmem, size = 0x12000, scoped, tag = 'internal scratch']
  %s0 = inlined_call_operand.hbm [shape: f32[64], index: 0, kind: input, shape index: {}]
  %s1 = inlined_call_operand.hbm [shape: f32[2,16,16], index: 1, kind: input, shape index: {}]
  %s2 = inlined_call_operand.vmem [shape: f32[2,4,13,13], index: 2, kind: output, shape index: {0}]
  %s3 = inlined_call_operand.vmem [shape: f32[2,4,13,13], index: 3, kind: output, shape index: {1}]
  %4 = xla_tuple %s2, %s3
  %s5 = sld [smem:[#allocation0]]
  $region57: #{tpu_custom_call.1} parent=0
    _
  %s7 = ssub.s32 1, %s5
  %s8 = scalar_select 0, %s7, %s5
  $region1: #{tpu_custom_call.1} parent=0
    #allocation2 [shape = 'u8[512]{0}', space=smem, size = 0x200, scoped, tag = 'input window, operand 0, single buffered']
    #allocation3 [shape = 's32[2]{0}', space=sflag, size = 0x8, scoped, tag = 'scoped memory for tpu_custom_call.1']
    #allocation4 [shape = 's32[2]{0}', space=sflag, size = 0x8, scoped, tag = 'scoped memory for tpu_custom_call.1']
    #allocation5 [shape = 'u8[16384]{0}', space=vmem, size = 0x4000, scoped, tag = 'input window, operand 1']
    %9 = vsyncpa [#allocation4], 0
    %10 = vsyncpa [#allocation3], 0
    %s11 = scalar_lea.sflag [#allocation3], 1
    %12 = vsyncpa %s11, 0
    loop: start=0, step=1, limit=4
    $region2: #{tpu_custom_call.1} parent=1 // loop_pre_header
      _
    $region3: #{tpu_custom_call.1} parent=1 // loop_header
      %s14 = sphi 0, %s18
      %p15 = scmp.ge.s32.totalorder %s14, 4
      %s22 = sphi 0, %s22
      %s24 = sphi 0, %s22
      %s25 = sphi 0, %s24
      %s39 = sphi 0, %s25
      %s45 = sphi 0, %s47
      %s48 = sphi 0, %s45
      %s49 = sphi 0, %s48
      %s65 = sphi 0, %s49
      %s71 = sphi 0, %s73
      %s74 = sphi 0, %s71
      %s75 = sphi 0, %s74
      %s91 = sphi 0, %s75
      %s97 = sphi 0, %s99
      %s100 = sphi 0, %s97
      %s101 = sphi 0, %s100
      %s117 = sphi 0, %s101
    $region4: #{tpu_custom_call.1} parent=1 // loop_header_branch
      %17 = sbr.rel (%p15) target = $region8
    $region5: #{tpu_custom_call.1} parent=1 // loop_body
      %s19 = ssub.s32 %s14, 1
      %s20 = ssub.s32 %s14, 2
      %s21 = sadd.s32 %s14, 1
      %s23 = sadd.s32 %s22, 1
      %p26 = scmp.eq.s32.totalorder %s14, 1
      %p27 = scmp.ne.s32.totalorder %s22, %s24
      %p28 = scmp.eq.s32.totalorder %s14, 0
      %p29 = por %p27, %p28
      %p30 = scmp.ne.s32.totalorder %s22, %s24
      %p31 = scmp.eq.s32.totalorder %s19, 1
      %p32 = por %p30, %p31
      %p33 = scmp.ne.s32.totalorder %s24, %s25
      %p34 = scmp.eq.s32.totalorder %s19, 0
      %p35 = por %p33, %p34
      %p36 = scmp.ne.s32.totalorder %s24, %s25
      %p37 = scmp.eq.s32.totalorder %s20, 1
      %p38 = por %p36, %p37
      %p40 = scmp.ne.s32.totalorder %s25, %s39
      %p41 = scmp.eq.s32.totalorder %s20, 0
      %p42 = por %p40, %p41
      %s43 = ssub.s32 %s14, %s21
      %p44 = scmp.eq.s32.totalorder %s43, 0
      %s46 = sadd.s32 %s45, 1
      %s47 = scalar_select %p44, %s45, %s46
      %p50 = pneg %p44
      %p51 = scmp.eq.s32.totalorder %s14, 1
      %p52 = por %p50, %p51
      %p53 = scmp.ne.s32.totalorder %s45, %s48
      %p54 = scmp.eq.s32.totalorder %s14, 0
      %p55 = por %p53, %p54
      %p56 = scmp.ne.s32.totalorder %s45, %s48
      %p57 = scmp.eq.s32.totalorder %s19, 1
      %p58 = por %p56, %p57
      %p59 = scmp.ne.s32.totalorder %s48, %s49
      %p60 = scmp.eq.s32.totalorder %s19, 0
      %p61 = por %p59, %p60
      %p62 = scmp.ne.s32.totalorder %s48, %s49
      %p63 = scmp.eq.s32.totalorder %s20, 1
      %p64 = por %p62, %p63
      %p66 = scmp.ne.s32.totalorder %s49, %s65
      %p67 = scmp.eq.s32.totalorder %s20, 0
      %p68 = por %p66, %p67
      %s69 = ssub.s32 %s14, %s21
      %p70 = scmp.eq.s32.totalorder %s69, 0
      %s72 = sadd.s32 %s71, 1
      %s73 = scalar_select %p70, %s71, %s72
      %p76 = pneg %p70
      %p77 = scmp.eq.s32.totalorder %s14, 1
      %p78 = por %p76, %p77
      %p79 = scmp.ne.s32.totalorder %s71, %s74
      %p80 = scmp.eq.s32.totalorder %s14, 0
      %p81 = por %p79, %p80
      %p82 = scmp.ne.s32.totalorder %s71, %s74
      %p83 = scmp.eq.s32.totalorder %s19, 1
      %p84 = por %p82, %p83
      %p85 = scmp.ne.s32.totalorder %s74, %s75
      %p86 = scmp.eq.s32.totalorder %s19, 0
      %p87 = por %p85, %p86
      %p88 = scmp.ne.s32.totalorder %s74, %s75
      %p89 = scmp.eq.s32.totalorder %s20, 1
      %p90 = por %p88, %p89
      %p92 = scmp.ne.s32.totalorder %s75, %s91
      %p93 = scmp.eq.s32.totalorder %s20, 0
      %p94 = por %p92, %p93
      %s95 = ssub.s32 %s14, %s21
      %p96 = scmp.eq.s32.totalorder %s95, 0
      %s98 = sadd.s32 %s97, 1
      %s99 = scalar_select %p96, %s97, %s98
      %p102 = pneg %p96
      %p103 = scmp.eq.s32.totalorder %s14, 1
      %p104 = por %p102, %p103
      %p105 = scmp.ne.s32.totalorder %s97, %s100
      %p106 = scmp.eq.s32.totalorder %s14, 0
      %p107 = por %p105, %p106
      %p108 = scmp.ne.s32.totalorder %s97, %s100
      %p109 = scmp.eq.s32.totalorder %s19, 1
      %p110 = por %p108, %p109
      %p111 = scmp.ne.s32.totalorder %s100, %s101
      %p112 = scmp.eq.s32.totalorder %s19, 0
      %p113 = por %p111, %p112
      %p114 = scmp.ne.s32.totalorder %s100, %s101
      %p115 = scmp.eq.s32.totalorder %s20, 1
      %p116 = por %p114, %p115
      %p118 = scmp.ne.s32.totalorder %s101, %s117
      %p119 = scmp.eq.s32.totalorder %s20, 0
      %p120 = por %p118, %p119
      %p121 = scmp.le.s32.totalorder 1, %s14
      %p122 = scmp.lt.s32.totalorder %s14, 3
      %p123 = pnand %p121, %p122
      %p124 = pneg %p123
      // Predicated region
      $region9: #{tpu_custom_call.1} parent=5 // pred_check
        _
      $region10: #{tpu_custom_call.1} parent=5 // pred_check_branch
        %126 = sbr.rel (%p123) target = $region12
      $region11: #{tpu_custom_call.1} parent=5 // pred_region
        %s127 = ssub.s32 %s14, 1
        // Predicated region
        $region13: #{tpu_custom_call.1} parent=11 // pred_check
          %p128 = pneg %p35
        $region14: #{tpu_custom_call.1} parent=11 // pred_check_branch
          %130 = sbr.rel (%p128) target = $region16
        $region15: #{tpu_custom_call.1} parent=11 // pred_region
          %s132 = ssub.s32 16, 16
          %133 = vsyncadd [#allocation4], %s132
          %136 = dma.hbm_to_smem %s0, 16, [#allocation2], [#allocation4]
        $region16: #{tpu_custom_call.1} parent=11 // pred_fallthru
          _
      $region12: #{tpu_custom_call.1} parent=5 // pred_fallthru
        _
      %p137 = scmp.lt.s32.totalorder %s14, 2
      // Predicated region
      $region17: #{tpu_custom_call.1} parent=5 // pred_check
        %p138 = pneg %p137
      $region18: #{tpu_custom_call.1} parent=5 // pred_check_branch
        %140 = sbr.rel (%p138) target = $region20
      $region19: #{tpu_custom_call.1} parent=5 // pred_region
        // Predicated region
        $region21: #{tpu_custom_call.1} parent=19 // pred_check
          %p141 = pneg %p55
        $region22: #{tpu_custom_call.1} parent=19 // pred_check_branch
          %143 = sbr.rel (%p141) target = $region24
        $region23: #{tpu_custom_call.1} parent=19 // pred_region
          %s144 = sand.u32 %s45, 1
          %s145 = scalar_lea.sflag [#allocation3], %s144
          %s146 = sand.u32 %s45, 1
          %s147 = smul.addr %s146, 16
          %s148 = scalar_lea.vmem [#allocation5], %s147
          %s150 = ssub.s32 256, 256
          %151 = vsyncadd %s145, %s150
          %s152 = smul.addr %s14, 2
          %s153 = smul.addr %s152, 128
          %s154 = scalar_lea.hbm %s1, %s153
          %s155 = sshll.u32 %s148, 4
          %s156 = int_to_ptr.vmem [resolvable:$true] %s155
          %161 = dma.hbm_to_vmem [thread:$0]  %s154, 256, %s156, %s145, 128, 128, 8
        $region24: #{tpu_custom_call.1} parent=19 // pred_fallthru
          _
      $region20: #{tpu_custom_call.1} parent=5 // pred_fallthru
        _
      %p162 = scmp.le.s32.totalorder 1, %s14
      %p163 = scmp.lt.s32.totalorder %s14, 3
      %p164 = pnand %p162, %p163
      %p165 = pneg %p164
      // Predicated region
      $region25: #{tpu_custom_call.1} parent=5 // pred_check
        _
      $region26: #{tpu_custom_call.1} parent=5 // pred_check_branch
        %167 = sbr.rel (%p164) target = $region28
      $region27: #{tpu_custom_call.1} parent=5 // pred_region
        %s168 = ssub.s32 %s14, 1
        // Predicated region
        $region29: #{tpu_custom_call.1} parent=27 // pred_check
          %p169 = pneg %p35
        $region30: #{tpu_custom_call.1} parent=27 // pred_check_branch
          %171 = sbr.rel (%p169) target = $region32
        $region31: #{tpu_custom_call.1} parent=27 // pred_region
          %172 = dma.done [#allocation4], 16
        $region32: #{tpu_custom_call.1} parent=27 // pred_fallthru
          _
        %s173 = sand.u32 %s48, 1
        %s174 = scalar_lea.sflag [#allocation3], %s173
        %s175 = sand.u32 %s48, 1
        %s176 = smul.addr %s175, 16
        %s177 = scalar_lea.vmem [#allocation5], %s176
        // Predicated region
        $region33: #{tpu_custom_call.1} parent=27 // pred_check
          %p178 = pneg %p61
        $region34: #{tpu_custom_call.1} parent=27 // pred_check_branch
          %180 = sbr.rel (%p178) target = $region36
        $region35: #{tpu_custom_call.1} parent=27 // pred_region
          %181 = dma.done %s174, 256
        $region36: #{tpu_custom_call.1} parent=27 // pred_fallthru
          _
        %182 = sfence
        %p183 = pneg %p35
        %p184 = pneg %p32
        %s185 = sand.u32 %s48, 1
        %s186 = scalar_lea.sflag [#allocation3], %s185
        %s187 = sand.u32 %s48, 1
        %s188 = smul.addr %s187, 16
        %s189 = scalar_lea.vmem [#allocation5], %s188
        %p190 = pneg %p61
        %p191 = pneg %p58
        %p192 = pneg %p87
        %p193 = pneg %p84
        %p194 = scmp.lt.s32.totalorder %s19, 1
        %s195 = scalar_select %p194, %s19, 1
        %s196 = smul.addr %s195, 8
        %s197 = smul.addr %s196, 8
        %s198 = scalar_lea.vmem %s2, %s197
        %p199 = pneg %p113
        %p200 = pneg %p110
        %p201 = scmp.lt.s32.totalorder %s19, 1
        %s202 = scalar_select %p201, %s19, 1
        %s203 = smul.addr %s202, 8
        %s204 = smul.addr %s203, 8
        %s205 = scalar_lea.vmem %s3, %s204
        %p206 = scmp.lt.s32.totalorder %s19, 1
        %s207 = scalar_select %p206, %s19, 1
        %s208 = smul.addr %s207, 8
        %s209 = smul.addr %s208, 8
        %s210 = scalar_lea.vmem %s2, %s209
        %p211 = scmp.lt.s32.totalorder %s19, 1
        %s212 = scalar_select %p211, %s19, 1
        %s213 = smul.addr %s212, 8
        %s214 = smul.addr %s213, 8
        %s215 = scalar_lea.vmem %s3, %s214
        %v216 = vld [vmem:[%s177] sm:$0xff]
        %v217 = vld [vmem:[%s177 + $0x8] sm:$0xff]
        %s218 = sld [smem:[#allocation2]]
        %v219 = vstv %s218
        %v220 = vmul.f32 %v219, %v216
        %v221 = vmul.f32 %v219, %v217
        %s222 = sld [smem:[#allocation2 + $0x10]]
        %v223 = vstv %s222
        %v224 = vmul.f32 %v223, %v216
        %v225 = vmul.f32 %v223, %v217
        %s226 = sld [smem:[#allocation2 + $0x20]]
        %v227 = vstv %s226
        %v228 = vmul.f32 %v227, %v216
        %v229 = vmul.f32 %v227, %v217
        %s230 = sld [smem:[#allocation2 + $0x30]]
        %v231 = vstv %s230
        %v232 = vmul.f32 %v231, %v216
        %v233 = vmul.f32 %v231, %v217
        %s234 = sld [smem:[#allocation2 + $0x4]]
        %v235 = vstv %s234
        %v236 = vmul.f32 %v235, %v216
        %v237 = vmul.f32 %v235, %v217
        %vm240 = vcmask 1046528
        %v241 = vrot.slane %v236, 1
        %v242 = vrot.slane %v237, 1
        %v243 = vsel %vm240, %v241, %v242
        %v246 = vadd.f32 %v220, %v243
        %v247 = vadd.f32 %v221, %v242
        %s248 = sld [smem:[#allocation2 + $0x14]]
        %v249 = vstv %s248
        %v250 = vmul.f32 %v249, %v216
        %v251 = vmul.f32 %v249, %v217
        %v254 = vrot.slane %v250, 1
        %v255 = vrot.slane %v251, 1
        %v256 = vsel %vm240, %v254, %v255
        %v259 = vadd.f32 %v224, %v256
        %v260 = vadd.f32 %v225, %v255
        %s261 = sld [smem:[#allocation2 + $0x24]]
        %v262 = vstv %s261
        %v263 = vmul.f32 %v262, %v216
        %v264 = vmul.f32 %v262, %v217
        %v267 = vrot.slane %v263, 1
        %v268 = vrot.slane %v264, 1
        %v269 = vsel %vm240, %v267, %v268
        %v272 = vadd.f32 %v228, %v269
        %v273 = vadd.f32 %v229, %v268
        %s274 = sld [smem:[#allocation2 + $0x34]]
        %v275 = vstv %s274
        %v276 = vmul.f32 %v275, %v216
        %v277 = vmul.f32 %v275, %v217
        %v280 = vrot.slane %v276, 1
        %v281 = vrot.slane %v277, 1
        %v282 = vsel %vm240, %v280, %v281
        %v285 = vadd.f32 %v232, %v282
        %v286 = vadd.f32 %v233, %v281
        %s287 = sld [smem:[#allocation2 + $0x8]]
        %v288 = vstv %s287
        %v289 = vmul.f32 %v288, %v216
        %v290 = vmul.f32 %v288, %v217
        %vm293 = vcmask 1045504
        %v294 = vrot.slane %v289, 2
        %v295 = vrot.slane %v290, 2
        %v296 = vsel %vm293, %v294, %v295
        %v299 = vadd.f32 %v246, %v296
        %v300 = vadd.f32 %v247, %v295
        %s301 = sld [smem:[#allocation2 + $0x18]]
        %v302 = vstv %s301
        %v303 = vmul.f32 %v302, %v216
        %v304 = vmul.f32 %v302, %v217
        %v307 = vrot.slane %v303, 2
        %v308 = vrot.slane %v304, 2
        %v309 = vsel %vm293, %v307, %v308
        %v312 = vadd.f32 %v259, %v309
        %v313 = vadd.f32 %v260, %v308
        %s314 = sld [smem:[#allocation2 + $0x28]]
        %v315 = vstv %s314
        %v316 = vmul.f32 %v315, %v216
        %v317 = vmul.f32 %v315, %v217
        %v320 = vrot.slane %v316, 2
        %v321 = vrot.slane %v317, 2
        %v322 = vsel %vm293, %v320, %v321
        %v325 = vadd.f32 %v272, %v322
        %v326 = vadd.f32 %v273, %v321
        %s327 = sld [smem:[#allocation2 + $0x38]]
        %v328 = vstv %s327
        %v329 = vmul.f32 %v328, %v216
        %v330 = vmul.f32 %v328, %v217
        %v333 = vrot.slane %v329, 2
        %v334 = vrot.slane %v330, 2
        %v335 = vsel %vm293, %v333, %v334
        %v338 = vadd.f32 %v285, %v335
        %v339 = vadd.f32 %v286, %v334
        %s340 = sld [smem:[#allocation2 + $0xc]]
        %v341 = vstv %s340
        %v342 = vmul.f32 %v341, %v216
        %v343 = vmul.f32 %v341, %v217
        %vm346 = vcmask 1044480
        %v347 = vrot.slane %v342, 3
        %v348 = vrot.slane %v343, 3
        %v349 = vsel %vm346, %v347, %v348
        %v352 = vadd.f32 %v299, %v349
        %v353 = vadd.f32 %v300, %v348
        %s354 = sld [smem:[#allocation2 + $0x1c]]
        %v355 = vstv %s354
        %v356 = vmul.f32 %v355, %v216
        %v357 = vmul.f32 %v355, %v217
        %v360 = vrot.slane %v356, 3
        %v361 = vrot.slane %v357, 3
        %v362 = vsel %vm346, %v360, %v361
        %v365 = vadd.f32 %v312, %v362
        %v366 = vadd.f32 %v313, %v361
        %s367 = sld [smem:[#allocation2 + $0x2c]]
        %v368 = vstv %s367
        %v369 = vmul.f32 %v368, %v216
        %v370 = vmul.f32 %v368, %v217
        %v373 = vrot.slane %v369, 3
        %v374 = vrot.slane %v370, 3
        %v375 = vsel %vm346, %v373, %v374
        %v378 = vadd.f32 %v325, %v375
        %v379 = vadd.f32 %v326, %v374
        %s380 = sld [smem:[#allocation2 + $0x3c]]
        %v381 = vstv %s380
        %v382 = vmul.f32 %v381, %v216
        %v383 = vmul.f32 %v381, %v217
        %v386 = vrot.slane %v382, 3
        %v387 = vrot.slane %v383, 3
        %v388 = vsel %vm346, %v386, %v387
        %v391 = vadd.f32 %v338, %v388
        %v392 = vadd.f32 %v339, %v387
        %s393 = sld [smem:[#allocation2 + $0x1]]
        %v394 = vstv %s393
        %v395 = vmul.f32 %v394, %v216
        %v396 = vmul.f32 %v394, %v217
        %399 = vrot.lane.b32.xlu0 %v395, 127
        %v400 = vpop.permute.xlu0 %399
        %401 = vrot.lane.b32.xlu0 %v396, 127
        %v402 = vpop.permute.xlu0 %401
        %v405 = vadd.f32 %v352, %v400
        %v406 = vadd.f32 %v353, %v402
        %s407 = sld [smem:[#allocation2 + $0x11]]
        %v408 = vstv %s407
        %v409 = vmul.f32 %v408, %v216
        %v410 = vmul.f32 %v408, %v217
        %413 = vrot.lane.b32.xlu0 %v409, 127
        %v414 = vpop.permute.xlu0 %413
        %415 = vrot.lane.b32.xlu0 %v410, 127
        %v416 = vpop.permute.xlu0 %415
        %v419 = vadd.f32 %v365, %v414
        %v420 = vadd.f32 %v366, %v416
        %s421 = sld [smem:[#allocation2 + $0x21]]
        %v422 = vstv %s421
        %v423 = vmul.f32 %v422, %v216
        %v424 = vmul.f32 %v422, %v217
        %427 = vrot.lane.b32.xlu0 %v423, 127
        %v428 = vpop.permute.xlu0 %427
        %429 = vrot.lane.b32.xlu0 %v424, 127
        %v430 = vpop.permute.xlu0 %429
        %v433 = vadd.f32 %v378, %v428
        %v434 = vadd.f32 %v379, %v430
        %s435 = sld [smem:[#allocation2 + $0x31]]
        %v436 = vstv %s435
        %v437 = vmul.f32 %v436, %v216
        %v438 = vmul.f32 %v436, %v217
        %441 = vrot.lane.b32.xlu0 %v437, 127
        %v442 = vpop.permute.xlu0 %441
        %443 = vrot.lane.b32.xlu0 %v438, 127
        %v444 = vpop.permute.xlu0 %443
        %v447 = vadd.f32 %v391, %v442
        %v448 = vadd.f32 %v392, %v444
        %s449 = sld [smem:[#allocation2 + $0x5]]
        %v450 = vstv %s449
        %v451 = vmul.f32 %v450, %v216
        %v452 = vmul.f32 %v450, %v217
        %v455 = vrot.slane %v451, 1
        %v456 = vrot.slane %v452, 1
        %v457 = vsel %vm240, %v455, %v456
        %458 = vrot.lane.b32.xlu0 %v457, 127
        %v459 = vpop.permute.xlu0 %458
        %460 = vrot.lane.b32.xlu0 %v456, 127
        %v461 = vpop.permute.xlu0 %460
        %v464 = vadd.f32 %v405, %v459
        %v465 = vadd.f32 %v406, %v461
        %s466 = sld [smem:[#allocation2 + $0x15]]
        %v467 = vstv %s466
        %v468 = vmul.f32 %v467, %v216
        %v469 = vmul.f32 %v467, %v217
        %v472 = vrot.slane %v468, 1
        %v473 = vrot.slane %v469, 1
        %v474 = vsel %vm240, %v472, %v473
        %475 = vrot.lane.b32.xlu0 %v474, 127
        %v476 = vpop.permute.xlu0 %475
        %477 = vrot.lane.b32.xlu0 %v473, 127
        %v478 = vpop.permute.xlu0 %477
        %v481 = vadd.f32 %v419, %v476
        %v482 = vadd.f32 %v420, %v478
        %s483 = sld [smem:[#allocation2 + $0x25]]
        %v484 = vstv %s483
        %v485 = vmul.f32 %v484, %v216
        %v486 = vmul.f32 %v484, %v217
        %v489 = vrot.slane %v485, 1
        %v490 = vrot.slane %v486, 1
        %v491 = vsel %vm240, %v489, %v490
        %492 = vrot.lane.b32.xlu0 %v491, 127
        %v493 = vpop.permute.xlu0 %492
        %494 = vrot.lane.b32.xlu0 %v490, 127
        %v495 = vpop.permute.xlu0 %494
        %v498 = vadd.f32 %v433, %v493
        %v499 = vadd.f32 %v434, %v495
        %s500 = sld [smem:[#allocation2 + $0x35]]
        %v501 = vstv %s500
        %v502 = vmul.f32 %v501, %v216
        %v503 = vmul.f32 %v501, %v217
        %v506 = vrot.slane %v502, 1
        %v507 = vrot.slane %v503, 1
        %v508 = vsel %vm240, %v506, %v507
        %509 = vrot.lane.b32.xlu0 %v508, 127
        %v510 = vpop.permute.xlu0 %509
        %511 = vrot.lane.b32.xlu0 %v507, 127
        %v512 = vpop.permute.xlu0 %511
        %v515 = vadd.f32 %v447, %v510
        %v516 = vadd.f32 %v448, %v512
        %s517 = sld [smem:[#allocation2 + $0x9]]
        %v518 = vstv %s517
        %v519 = vmul.f32 %v518, %v216
        %v520 = vmul.f32 %v518, %v217
        %v523 = vrot.slane %v519, 2
        %v524 = vrot.slane %v520, 2
        %v525 = vsel %vm293, %v523, %v524
        %526 = vrot.lane.b32.xlu0 %v525, 127
        %v527 = vpop.permute.xlu0 %526
        %528 = vrot.lane.b32.xlu0 %v524, 127
        %v529 = vpop.permute.xlu0 %528
        %v532 = vadd.f32 %v464, %v527
        %v533 = vadd.f32 %v465, %v529
        %s534 = sld [smem:[#allocation2 + $0x19]]
        %v535 = vstv %s534
        %v536 = vmul.f32 %v535, %v216
        %v537 = vmul.f32 %v535, %v217
        %v540 = vrot.slane %v536, 2
        %v541 = vrot.slane %v537, 2
        %v542 = vsel %vm293, %v540, %v541
        %543 = vrot.lane.b32.xlu0 %v542, 127
        %v544 = vpop.permute.xlu0 %543
        %545 = vrot.lane.b32.xlu0 %v541, 127
        %v546 = vpop.permute.xlu0 %545
        %v549 = vadd.f32 %v481, %v544
        %v550 = vadd.f32 %v482, %v546
        %s551 = sld [smem:[#allocation2 + $0x29]]
        %v552 = vstv %s551
        %v553 = vmul.f32 %v552, %v216
        %v554 = vmul.f32 %v552, %v217
        %v557 = vrot.slane %v553, 2
        %v558 = vrot.slane %v554, 2
        %v559 = vsel %vm293, %v557, %v558
        %560 = vrot.lane.b32.xlu0 %v559, 127
        %v561 = vpop.permute.xlu0 %560
        %562 = vrot.lane.b32.xlu0 %v558, 127
        %v563 = vpop.permute.xlu0 %562
        %v566 = vadd.f32 %v498, %v561
        %v567 = vadd.f32 %v499, %v563
        %s568 = sld [smem:[#allocation2 + $0x39]]
        %v569 = vstv %s568
        %v570 = vmul.f32 %v569, %v216
        %v571 = vmul.f32 %v569, %v217
        %v574 = vrot.slane %v570, 2
        %v575 = vrot.slane %v571, 2
        %v576 = vsel %vm293, %v574, %v575
        %577 = vrot.lane.b32.xlu0 %v576, 127
        %v578 = vpop.permute.xlu0 %577
        %579 = vrot.lane.b32.xlu0 %v575, 127
        %v580 = vpop.permute.xlu0 %579
        %v583 = vadd.f32 %v515, %v578
        %v584 = vadd.f32 %v516, %v580
        %s585 = sld [smem:[#allocation2 + $0xd]]
        %v586 = vstv %s585
        %v587 = vmul.f32 %v586, %v216
        %v588 = vmul.f32 %v586, %v217
        %v591 = vrot.slane %v587, 3
        %v592 = vrot.slane %v588, 3
        %v593 = vsel %vm346, %v591, %v592
        %594 = vrot.lane.b32.xlu0 %v593, 127
        %v595 = vpop.permute.xlu0 %594
        %596 = vrot.lane.b32.xlu0 %v592, 127
        %v597 = vpop.permute.xlu0 %596
        %v600 = vadd.f32 %v532, %v595
        %v601 = vadd.f32 %v533, %v597
        %s602 = sld [smem:[#allocation2 + $0x1d]]
        %v603 = vstv %s602
        %v604 = vmul.f32 %v603, %v216
        %v605 = vmul.f32 %v603, %v217
        %v608 = vrot.slane %v604, 3
        %v609 = vrot.slane %v605, 3
        %v610 = vsel %vm346, %v608, %v609
        %611 = vrot.lane.b32.xlu0 %v610, 127
        %v612 = vpop.permute.xlu0 %611
        %613 = vrot.lane.b32.xlu0 %v609, 127
        %v614 = vpop.permute.xlu0 %613
        %v617 = vadd.f32 %v549, %v612
        %v618 = vadd.f32 %v550, %v614
        %s619 = sld [smem:[#allocation2 + $0x2d]]
        %v620 = vstv %s619
        %v621 = vmul.f32 %v620, %v216
        %v622 = vmul.f32 %v620, %v217
        %v625 = vrot.slane %v621, 3
        %v626 = vrot.slane %v622, 3
        %v627 = vsel %vm346, %v625, %v626
        %628 = vrot.lane.b32.xlu0 %v627, 127
        %v629 = vpop.permute.xlu0 %628
        %630 = vrot.lane.b32.xlu0 %v626, 127
        %v631 = vpop.permute.xlu0 %630
        %v634 = vadd.f32 %v566, %v629
        %v635 = vadd.f32 %v567, %v631
        %s636 = sld [smem:[#allocation2 + $0x3d]]
        %v637 = vstv %s636
        %v638 = vmul.f32 %v637, %v216
        %v639 = vmul.f32 %v637, %v217
        %v642 = vrot.slane %v638, 3
        %v643 = vrot.slane %v639, 3
        %v644 = vsel %vm346, %v642, %v643
        %645 = vrot.lane.b32.xlu0 %v644, 127
        %v646 = vpop.permute.xlu0 %645
        %647 = vrot.lane.b32.xlu0 %v643, 127
        %v648 = vpop.permute.xlu0 %647
        %v651 = vadd.f32 %v583, %v646
        %v652 = vadd.f32 %v584, %v648
        %s653 = sld [smem:[#allocation2 + $0x2]]
        %v654 = vstv %s653
        %v655 = vmul.f32 %v654, %v216
        %v656 = vmul.f32 %v654, %v217
        %659 = vrot.lane.b32.xlu0 %v655, 126
        %v660 = vpop.permute.xlu0 %659
        %661 = vrot.lane.b32.xlu0 %v656, 126
        %v662 = vpop.permute.xlu0 %661
        %v665 = vadd.f32 %v600, %v660
        %v666 = vadd.f32 %v601, %v662
        %s667 = sld [smem:[#allocation2 + $0x12]]
        %v668 = vstv %s667
        %v669 = vmul.f32 %v668, %v216
        %v670 = vmul.f32 %v668, %v217
        %673 = vrot.lane.b32.xlu0 %v669, 126
        %v674 = vpop.permute.xlu0 %673
        %675 = vrot.lane.b32.xlu0 %v670, 126
        %v676 = vpop.permute.xlu0 %675
        %v679 = vadd.f32 %v617, %v674
        %v680 = vadd.f32 %v618, %v676
        %s681 = sld [smem:[#allocation2 + $0x22]]
        %v682 = vstv %s681
        %v683 = vmul.f32 %v682, %v216
        %v684 = vmul.f32 %v682, %v217
        %687 = vrot.lane.b32.xlu0 %v683, 126
        %v688 = vpop.permute.xlu0 %687
        %689 = vrot.lane.b32.xlu0 %v684, 126
        %v690 = vpop.permute.xlu0 %689
        %v693 = vadd.f32 %v634, %v688
        %v694 = vadd.f32 %v635, %v690
        %s695 = sld [smem:[#allocation2 + $0x32]]
        %v696 = vstv %s695
        %v697 = vmul.f32 %v696, %v216
        %v698 = vmul.f32 %v696, %v217
        %701 = vrot.lane.b32.xlu0 %v697, 126
        %v702 = vpop.permute.xlu0 %701
        %703 = vrot.lane.b32.xlu0 %v698, 126
        %v704 = vpop.permute.xlu0 %703
        %v707 = vadd.f32 %v651, %v702
        %v708 = vadd.f32 %v652, %v704
        %s709 = sld [smem:[#allocation2 + $0x6]]
        %v710 = vstv %s709
        %v711 = vmul.f32 %v710, %v216
        %v712 = vmul.f32 %v710, %v217
        %v715 = vrot.slane %v711, 1
        %v716 = vrot.slane %v712, 1
        %v717 = vsel %vm240, %v715, %v716
        %718 = vrot.lane.b32.xlu0 %v717, 126
        %v719 = vpop.permute.xlu0 %718
        %720 = vrot.lane.b32.xlu0 %v716, 126
        %v721 = vpop.permute.xlu0 %720
        %v724 = vadd.f32 %v665, %v719
        %v725 = vadd.f32 %v666, %v721
        %s726 = sld [smem:[#allocation2 + $0x16]]
        %v727 = vstv %s726
        %v728 = vmul.f32 %v727, %v216
        %v729 = vmul.f32 %v727, %v217
        %v732 = vrot.slane %v728, 1
        %v733 = vrot.slane %v729, 1
        %v734 = vsel %vm240, %v732, %v733
        %735 = vrot.lane.b32.xlu0 %v734, 126
        %v736 = vpop.permute.xlu0 %735
        %737 = vrot.lane.b32.xlu0 %v733, 126
        %v738 = vpop.permute.xlu0 %737
        %v741 = vadd.f32 %v679, %v736
        %v742 = vadd.f32 %v680, %v738
        %s743 = sld [smem:[#allocation2 + $0x26]]
        %v744 = vstv %s743
        %v745 = vmul.f32 %v744, %v216
        %v746 = vmul.f32 %v744, %v217
        %v749 = vrot.slane %v745, 1
        %v750 = vrot.slane %v746, 1
        %v751 = vsel %vm240, %v749, %v750
        %752 = vrot.lane.b32.xlu0 %v751, 126
        %v753 = vpop.permute.xlu0 %752
        %754 = vrot.lane.b32.xlu0 %v750, 126
        %v755 = vpop.permute.xlu0 %754
        %v758 = vadd.f32 %v693, %v753
        %v759 = vadd.f32 %v694, %v755
        %s760 = sld [smem:[#allocation2 + $0x36]]
        %v761 = vstv %s760
        %v762 = vmul.f32 %v761, %v216
        %v763 = vmul.f32 %v761, %v217
        %v766 = vrot.slane %v762, 1
        %v767 = vrot.slane %v763, 1
        %v768 = vsel %vm240, %v766, %v767
        %769 = vrot.lane.b32.xlu0 %v768, 126
        %v770 = vpop.permute.xlu0 %769
        %771 = vrot.lane.b32.xlu0 %v767, 126
        %v772 = vpop.permute.xlu0 %771
        %v775 = vadd.f32 %v707, %v770
        %v776 = vadd.f32 %v708, %v772
        %s777 = sld [smem:[#allocation2 + $0xa]]
        %v778 = vstv %s777
        %v779 = vmul.f32 %v778, %v216
        %v780 = vmul.f32 %v778, %v217
        %v783 = vrot.slane %v779, 2
        %v784 = vrot.slane %v780, 2
        %v785 = vsel %vm293, %v783, %v784
        %786 = vrot.lane.b32.xlu0 %v785, 126
        %v787 = vpop.permute.xlu0 %786
        %788 = vrot.lane.b32.xlu0 %v784, 126
        %v789 = vpop.permute.xlu0 %788
        %v792 = vadd.f32 %v724, %v787
        %v793 = vadd.f32 %v725, %v789
        %s794 = sld [smem:[#allocation2 + $0x1a]]
        %v795 = vstv %s794
        %v796 = vmul.f32 %v795, %v216
        %v797 = vmul.f32 %v795, %v217
        %v800 = vrot.slane %v796, 2
        %v801 = vrot.slane %v797, 2
        %v802 = vsel %vm293, %v800, %v801
        %803 = vrot.lane.b32.xlu0 %v802, 126
        %v804 = vpop.permute.xlu0 %803
        %805 = vrot.lane.b32.xlu0 %v801, 126
        %v806 = vpop.permute.xlu0 %805
        %v809 = vadd.f32 %v741, %v804
        %v810 = vadd.f32 %v742, %v806
        %s811 = sld [smem:[#allocation2 + $0x2a]]
        %v812 = vstv %s811
        %v813 = vmul.f32 %v812, %v216
        %v814 = vmul.f32 %v812, %v217
        %v817 = vrot.slane %v813, 2
        %v818 = vrot.slane %v814, 2
        %v819 = vsel %vm293, %v817, %v818
        %820 = vrot.lane.b32.xlu0 %v819, 126
        %v821 = vpop.permute.xlu0 %820
        %822 = vrot.lane.b32.xlu0 %v818, 126
        %v823 = vpop.permute.xlu0 %822
        %v826 = vadd.f32 %v758, %v821
        %v827 = vadd.f32 %v759, %v823
        %s828 = sld [smem:[#allocation2 + $0x3a]]
        %v829 = vstv %s828
        %v830 = vmul.f32 %v829, %v216
        %v831 = vmul.f32 %v829, %v217
        %v834 = vrot.slane %v830, 2
        %v835 = vrot.slane %v831, 2
        %v836 = vsel %vm293, %v834, %v835
        %837 = vrot.lane.b32.xlu0 %v836, 126
        %v838 = vpop.permute.xlu0 %837
        %839 = vrot.lane.b32.xlu0 %v835, 126
        %v840 = vpop.permute.xlu0 %839
        %v843 = vadd.f32 %v775, %v838
        %v844 = vadd.f32 %v776, %v840
        %s845 = sld [smem:[#allocation2 + $0xe]]
        %v846 = vstv %s845
        %v847 = vmul.f32 %v846, %v216
        %v848 = vmul.f32 %v846, %v217
        %v851 = vrot.slane %v847, 3
        %v852 = vrot.slane %v848, 3
        %v853 = vsel %vm346, %v851, %v852
        %854 = vrot.lane.b32.xlu0 %v853, 126
        %v855 = vpop.permute.xlu0 %854
        %856 = vrot.lane.b32.xlu0 %v852, 126
        %v857 = vpop.permute.xlu0 %856
        %v860 = vadd.f32 %v792, %v855
        %v861 = vadd.f32 %v793, %v857
        %s862 = sld [smem:[#allocation2 + $0x1e]]
        %v863 = vstv %s862
        %v864 = vmul.f32 %v863, %v216
        %v865 = vmul.f32 %v863, %v217
        %v868 = vrot.slane %v864, 3
        %v869 = vrot.slane %v865, 3
        %v870 = vsel %vm346, %v868, %v869
        %871 = vrot.lane.b32.xlu0 %v870, 126
        %v872 = vpop.permute.xlu0 %871
        %873 = vrot.lane.b32.xlu0 %v869, 126
        %v874 = vpop.permute.xlu0 %873
        %v877 = vadd.f32 %v809, %v872
        %v878 = vadd.f32 %v810, %v874
        %s879 = sld [smem:[#allocation2 + $0x2e]]
        %v880 = vstv %s879
        %v881 = vmul.f32 %v880, %v216
        %v882 = vmul.f32 %v880, %v217
        %v885 = vrot.slane %v881, 3
        %v886 = vrot.slane %v882, 3
        %v887 = vsel %vm346, %v885, %v886
        %888 = vrot.lane.b32.xlu0 %v887, 126
        %v889 = vpop.permute.xlu0 %888
        %890 = vrot.lane.b32.xlu0 %v886, 126
        %v891 = vpop.permute.xlu0 %890
        %v894 = vadd.f32 %v826, %v889
        %v895 = vadd.f32 %v827, %v891
        %s896 = sld [smem:[#allocation2 + $0x3e]]
        %v897 = vstv %s896
        %v898 = vmul.f32 %v897, %v216
        %v899 = vmul.f32 %v897, %v217
        %v902 = vrot.slane %v898, 3
        %v903 = vrot.slane %v899, 3
        %v904 = vsel %vm346, %v902, %v903
        %905 = vrot.lane.b32.xlu0 %v904, 126
        %v906 = vpop.permute.xlu0 %905
        %907 = vrot.lane.b32.xlu0 %v903, 126
        %v908 = vpop.permute.xlu0 %907
        %v911 = vadd.f32 %v843, %v906
        %v912 = vadd.f32 %v844, %v908
        %s913 = sld [smem:[#allocation2 + $0x3]]
        %v914 = vstv %s913
        %v915 = vmul.f32 %v914, %v216
        %v916 = vmul.f32 %v914, %v217
        %919 = vrot.lane.b32.xlu0 %v915, 125
        %v920 = vpop.permute.xlu0 %919
        %921 = vrot.lane.b32.xlu0 %v916, 125
        %v922 = vpop.permute.xlu0 %921
        %v925 = vadd.f32 %v860, %v920
        %v926 = vadd.f32 %v861, %v922
        %s927 = sld [smem:[#allocation2 + $0x13]]
        %v928 = vstv %s927
        %v929 = vmul.f32 %v928, %v216
        %v930 = vmul.f32 %v928, %v217
        %933 = vrot.lane.b32.xlu0 %v929, 125
        %v934 = vpop.permute.xlu0 %933
        %935 = vrot.lane.b32.xlu0 %v930, 125
        %v936 = vpop.permute.xlu0 %935
        %v939 = vadd.f32 %v877, %v934
        %v940 = vadd.f32 %v878, %v936
        %s941 = sld [smem:[#allocation2 + $0x23]]
        %v942 = vstv %s941
        %v943 = vmul.f32 %v942, %v216
        %v944 = vmul.f32 %v942, %v217
        %947 = vrot.lane.b32.xlu0 %v943, 125
        %v948 = vpop.permute.xlu0 %947
        %949 = vrot.lane.b32.xlu0 %v944, 125
        %v950 = vpop.permute.xlu0 %949
        %v953 = vadd.f32 %v894, %v948
        %v954 = vadd.f32 %v895, %v950
        %s955 = sld [smem:[#allocation2 + $0x33]]
        %v956 = vstv %s955
        %v957 = vmul.f32 %v956, %v216
        %v958 = vmul.f32 %v956, %v217
        %961 = vrot.lane.b32.xlu0 %v957, 125
        %v962 = vpop.permute.xlu0 %961
        %963 = vrot.lane.b32.xlu0 %v958, 125
        %v964 = vpop.permute.xlu0 %963
        %v967 = vadd.f32 %v911, %v962
        %v968 = vadd.f32 %v912, %v964
        %s969 = sld [smem:[#allocation2 + $0x7]]
        %v970 = vstv %s969
        %v971 = vmul.f32 %v970, %v216
        %v972 = vmul.f32 %v970, %v217
        %v975 = vrot.slane %v971, 1
        %v976 = vrot.slane %v972, 1
        %v977 = vsel %vm240, %v975, %v976
        %978 = vrot.lane.b32.xlu0 %v977, 125
        %v979 = vpop.permute.xlu0 %978
        %980 = vrot.lane.b32.xlu0 %v976, 125
        %v981 = vpop.permute.xlu0 %980
        %v984 = vadd.f32 %v925, %v979
        %v985 = vadd.f32 %v926, %v981
        %s986 = sld [smem:[#allocation2 + $0x17]]
        %v987 = vstv %s986
        %v988 = vmul.f32 %v987, %v216
        %v989 = vmul.f32 %v987, %v217
        %v992 = vrot.slane %v988, 1
        %v993 = vrot.slane %v989, 1
        %v994 = vsel %vm240, %v992, %v993
        %995 = vrot.lane.b32.xlu0 %v994, 125
        %v996 = vpop.permute.xlu0 %995
        %997 = vrot.lane.b32.xlu0 %v993, 125
        %v998 = vpop.permute.xlu0 %997
        %v1001 = vadd.f32 %v939, %v996
        %v1002 = vadd.f32 %v940, %v998
        %s1003 = sld [smem:[#allocation2 + $0x27]]
        %v1004 = vstv %s1003
        %v1005 = vmul.f32 %v1004, %v216
        %v1006 = vmul.f32 %v1004, %v217
        %v1009 = vrot.slane %v1005, 1
        %v1010 = vrot.slane %v1006, 1
        %v1011 = vsel %vm240, %v1009, %v1010
        %1012 = vrot.lane.b32.xlu0 %v1011, 125
        %v1013 = vpop.permute.xlu0 %1012
        %1014 = vrot.lane.b32.xlu0 %v1010, 125
        %v1015 = vpop.permute.xlu0 %1014
        %v1018 = vadd.f32 %v953, %v1013
        %v1019 = vadd.f32 %v954, %v1015
        %s1020 = sld [smem:[#allocation2 + $0x37]]
        %v1021 = vstv %s1020
        %v1022 = vmul.f32 %v1021, %v216
        %v1023 = vmul.f32 %v1021, %v217
        %v1026 = vrot.slane %v1022, 1
        %v1027 = vrot.slane %v1023, 1
        %v1028 = vsel %vm240, %v1026, %v1027
        %1029 = vrot.lane.b32.xlu0 %v1028, 125
        %v1030 = vpop.permute.xlu0 %1029
        %1031 = vrot.lane.b32.xlu0 %v1027, 125
        %v1032 = vpop.permute.xlu0 %1031
        %v1035 = vadd.f32 %v967, %v1030
        %v1036 = vadd.f32 %v968, %v1032
        %s1037 = sld [smem:[#allocation2 + $0xb]]
        %v1038 = vstv %s1037
        %v1039 = vmul.f32 %v1038, %v216
        %v1040 = vmul.f32 %v1038, %v217
        %v1043 = vrot.slane %v1039, 2
        %v1044 = vrot.slane %v1040, 2
        %v1045 = vsel %vm293, %v1043, %v1044
        %1046 = vrot.lane.b32.xlu0 %v1045, 125
        %v1047 = vpop.permute.xlu0 %1046
        %1048 = vrot.lane.b32.xlu0 %v1044, 125
        %v1049 = vpop.permute.xlu0 %1048
        %v1052 = vadd.f32 %v984, %v1047
        %v1053 = vadd.f32 %v985, %v1049
        %s1054 = sld [smem:[#allocation2 + $0x1b]]
        %v1055 = vstv %s1054
        %v1056 = vmul.f32 %v1055, %v216
        %v1057 = vmul.f32 %v1055, %v217
        %v1060 = vrot.slane %v1056, 2
        %v1061 = vrot.slane %v1057, 2
        %v1062 = vsel %vm293, %v1060, %v1061
        %1063 = vrot.lane.b32.xlu0 %v1062, 125
        %v1064 = vpop.permute.xlu0 %1063
        %1065 = vrot.lane.b32.xlu0 %v1061, 125
        %v1066 = vpop.permute.xlu0 %1065
        %v1069 = vadd.f32 %v1001, %v1064
        %v1070 = vadd.f32 %v1002, %v1066
        %s1071 = sld [smem:[#allocation2 + $0x2b]]
        %v1072 = vstv %s1071
        %v1073 = vmul.f32 %v1072, %v216
        %v1074 = vmul.f32 %v1072, %v217
        %v1077 = vrot.slane %v1073, 2
        %v1078 = vrot.slane %v1074, 2
        %v1079 = vsel %vm293, %v1077, %v1078
        %1080 = vrot.lane.b32.xlu0 %v1079, 125
        %v1081 = vpop.permute.xlu0 %1080
        %1082 = vrot.lane.b32.xlu0 %v1078, 125
        %v1083 = vpop.permute.xlu0 %1082
        %v1086 = vadd.f32 %v1018, %v1081
        %v1087 = vadd.f32 %v1019, %v1083
        %s1088 = sld [smem:[#allocation2 + $0x3b]]
        %v1089 = vstv %s1088
        %v1090 = vmul.f32 %v1089, %v216
        %v1091 = vmul.f32 %v1089, %v217
        %v1094 = vrot.slane %v1090, 2
        %v1095 = vrot.slane %v1091, 2
        %v1096 = vsel %vm293, %v1094, %v1095
        %1097 = vrot.lane.b32.xlu0 %v1096, 125
        %v1098 = vpop.permute.xlu0 %1097
        %1099 = vrot.lane.b32.xlu0 %v1095, 125
        %v1100 = vpop.permute.xlu0 %1099
        %v1103 = vadd.f32 %v1035, %v1098
        %v1104 = vadd.f32 %v1036, %v1100
        %s1105 = sld [smem:[#allocation2 + $0xf]]
        %v1106 = vstv %s1105
        %v1107 = vmul.f32 %v1106, %v216
        %v1108 = vmul.f32 %v1106, %v217
        %v1111 = vrot.slane %v1107, 3
        %v1112 = vrot.slane %v1108, 3
        %v1113 = vsel %vm346, %v1111, %v1112
        %1114 = vrot.lane.b32.xlu0 %v1113, 125
        %v1115 = vpop.permute.xlu0 %1114
        %1116 = vrot.lane.b32.xlu0 %v1112, 125
        %v1117 = vpop.permute.xlu0 %1116
        %v1120 = vadd.f32 %v1052, %v1115
        %v1121 = vadd.f32 %v1053, %v1117
        %s1122 = sld [smem:[#allocation2 + $0x1f]]
        %v1123 = vstv %s1122
        %v1124 = vmul.f32 %v1123, %v216
        %v1125 = vmul.f32 %v1123, %v217
        %v1128 = vrot.slane %v1124, 3
        %v1129 = vrot.slane %v1125, 3
        %v1130 = vsel %vm346, %v1128, %v1129
        %1131 = vrot.lane.b32.xlu0 %v1130, 125
        %v1132 = vpop.permute.xlu0 %1131
        %1133 = vrot.lane.b32.xlu0 %v1129, 125
        %v1134 = vpop.permute.xlu0 %1133
        %v1137 = vadd.f32 %v1069, %v1132
        %v1138 = vadd.f32 %v1070, %v1134
        %s1139 = sld [smem:[#allocation2 + $0x2f]]
        %v1140 = vstv %s1139
        %v1141 = vmul.f32 %v1140, %v216
        %v1142 = vmul.f32 %v1140, %v217
        %v1145 = vrot.slane %v1141, 3
        %v1146 = vrot.slane %v1142, 3
        %v1147 = vsel %vm346, %v1145, %v1146
        %1148 = vrot.lane.b32.xlu0 %v1147, 125
        %v1149 = vpop.permute.xlu0 %1148
        %1150 = vrot.lane.b32.xlu0 %v1146, 125
        %v1151 = vpop.permute.xlu0 %1150
        %v1154 = vadd.f32 %v1086, %v1149
        %v1155 = vadd.f32 %v1087, %v1151
        %s1156 = sld [smem:[#allocation2 + $0x3f]]
        %v1157 = vstv %s1156
        %v1158 = vmul.f32 %v1157, %v216
        %v1159 = vmul.f32 %v1157, %v217
        %v1162 = vrot.slane %v1158, 3
        %v1163 = vrot.slane %v1159, 3
        %v1164 = vsel %vm346, %v1162, %v1163
        %1165 = vrot.lane.b32.xlu0 %v1164, 125
        %v1166 = vpop.permute.xlu0 %1165
        %1167 = vrot.lane.b32.xlu0 %v1163, 125
        %v1168 = vpop.permute.xlu0 %1167
        %v1171 = vadd.f32 %v1103, %v1166
        %v1172 = vadd.f32 %v1104, %v1168
        %vm1173 = vcmask 105472
        %1174 = vst.msk [vmem:[%s210] sm:$0xff] %vm1173, %v1120
        %vm1175 = vcmask 102400
        %1176 = vst.msk [vmem:[%s210 + $0x8] sm:$0x1f] %vm1175, %v1121
        %v1177 = vmax.f32 %v1120, 0.0
        %v1178 = vmax.f32 %v1121, 0.0
        %1179 = vst.msk [vmem:[%s215] sm:$0xff] %vm1173, %v1177
        %1180 = vst.msk [vmem:[%s215 + $0x8] sm:$0x1f] %vm1175, %v1178
        %s1181 = scalar_lea.vmem %s210, 16
        %1182 = vst.msk [vmem:[%s1181] sm:$0xff] %vm1173, %v1137
        %1183 = vst.msk [vmem:[%s1181 + $0x8] sm:$0x1f] %vm1175, %v1138
        %v1184 = vmax.f32 %v1137, 0.0
        %v1185 = vmax.f32 %v1138, 0.0
        %s1186 = scalar_lea.vmem %s215, 16
        %1187 = vst.msk [vmem:[%s1186] sm:$0xff] %vm1173, %v1184
        %1188 = vst.msk [vmem:[%s1186 + $0x8] sm:$0x1f] %vm1175, %v1185
        %s1189 = scalar_lea.vmem %s210, 32
        %1190 = vst.msk [vmem:[%s1189] sm:$0xff] %vm1173, %v1154
        %1191 = vst.msk [vmem:[%s1189 + $0x8] sm:$0x1f] %vm1175, %v1155
        %v1192 = vmax.f32 %v1154, 0.0
        %v1193 = vmax.f32 %v1155, 0.0
        %s1194 = scalar_lea.vmem %s215, 32
        %1195 = vst.msk [vmem:[%s1194] sm:$0xff] %vm1173, %v1192
        %1196 = vst.msk [vmem:[%s1194 + $0x8] sm:$0x1f] %vm1175, %v1193
        %s1197 = scalar_lea.vmem %s210, 48
        %1198 = vst.msk [vmem:[%s1197] sm:$0xff] %vm1173, %v1171
        %1199 = vst.msk [vmem:[%s1197 + $0x8] sm:$0x1f] %vm1175, %v1172
        %v1200 = vmax.f32 %v1171, 0.0
        %v1201 = vmax.f32 %v1172, 0.0
        %s1202 = scalar_lea.vmem %s215, 48
        %1203 = vst.msk [vmem:[%s1202] sm:$0xff] %vm1173, %v1200
        %1204 = vst.msk [vmem:[%s1202 + $0x8] sm:$0x1f] %vm1175, %v1201
        %p1205 = scmp.lt.s32.totalorder %s19, 1
        %s1206 = scalar_select %p1205, %s19, 1
        %s1207 = smul.addr %s1206, 8
        %s1208 = smul.addr %s1207, 8
        %s1209 = scalar_lea.vmem %s2, %s1208
        %p1210 = scmp.lt.s32.totalorder %s19, 1
        %s1211 = scalar_select %p1210, %s19, 1
        %s1212 = smul.addr %s1211, 8
        %s1213 = smul.addr %s1212, 8
        %s1214 = scalar_lea.vmem %s3, %s1213
        // Predicated region
        $region37: #{tpu_custom_call.1} parent=27 // pred_check
          %p1215 = pneg %p84
        $region38: #{tpu_custom_call.1} parent=27 // pred_check_branch
          %1217 = sbr.rel (%p1215) target = $region40
        $region39: #{tpu_custom_call.1} parent=27 // pred_region
          _
        $region40: #{tpu_custom_call.1} parent=27 // pred_fallthru
          _
        // Predicated region
        $region41: #{tpu_custom_call.1} parent=27 // pred_check
          %p1218 = pneg %p110
        $region42: #{tpu_custom_call.1} parent=27 // pred_check_branch
          %1220 = sbr.rel (%p1218) target = $region44
        $region43: #{tpu_custom_call.1} parent=27 // pred_region
          _
        $region44: #{tpu_custom_call.1} parent=27 // pred_fallthru
          _
      $region28: #{tpu_custom_call.1} parent=5 // pred_fallthru
        _
      %p1221 = scmp.le.s32.totalorder 2, %s14
      // Predicated region
      $region45: #{tpu_custom_call.1} parent=5 // pred_check
        %p1222 = pneg %p1221
      $region46: #{tpu_custom_call.1} parent=5 // pred_check_branch
        %1224 = sbr.rel (%p1222) target = $region48
      $region47: #{tpu_custom_call.1} parent=5 // pred_region
        %s1225 = ssub.s32 %s14, 2
        // Predicated region
        $region49: #{tpu_custom_call.1} parent=47 // pred_check
          %p1226 = pneg %p90
        $region50: #{tpu_custom_call.1} parent=47 // pred_check_branch
          %1228 = sbr.rel (%p1226) target = $region52
        $region51: #{tpu_custom_call.1} parent=47 // pred_region
          %p1229 = scmp.lt.s32.totalorder %s20, 1
          %s1230 = scalar_select %p1229, %s20, 1
          %s1231 = smul.addr %s1230, 8
          %s1232 = smul.addr %s1231, 8
          %s1233 = scalar_lea.vmem %s2, %s1232
        $region52: #{tpu_custom_call.1} parent=47 // pred_fallthru
          _
        // Predicated region
        $region53: #{tpu_custom_call.1} parent=47 // pred_check
          %p1234 = pneg %p116
        $region54: #{tpu_custom_call.1} parent=47 // pred_check_branch
          %1236 = sbr.rel (%p1234) target = $region56
        $region55: #{tpu_custom_call.1} parent=47 // pred_region
          %p1237 = scmp.lt.s32.totalorder %s20, 1
          %s1238 = scalar_select %p1237, %s20, 1
          %s1239 = smul.addr %s1238, 8
          %s1240 = smul.addr %s1239, 8
          %s1241 = scalar_lea.vmem %s3, %s1240
        $region56: #{tpu_custom_call.1} parent=47 // pred_fallthru
          _
      $region48: #{tpu_custom_call.1} parent=5 // pred_fallthru
        _
    $region6: #{tpu_custom_call.1} parent=1 // loop_footer
      %s18 = sadd.s32 1, %s14
    $region7: #{tpu_custom_call.1} parent=1 // loop_footer_branch
      %13 = sbr.rel target = $region3
    $region8: #{tpu_custom_call.1} parent=1 // loop_exit
      _
    %1242 = vsyncpa [#allocation3], 1
    %s1243 = scalar_lea.sflag [#allocation3], 1
    %1244 = vsyncpa %s1243, 1
    %1245 = vsyncpa [#allocation4], 1
    %s1246 = scalar_lea.sflag [#allocation4], 1
    %1247 = vsyncpa %s1246, 1

</llo_original>
